<compile_context>
chip_gen: v7x
topology: tpu7x:2x2x1
jax: 0.10.0
libtpu: 0.0.40
codegen_flags: <defaults>
</compile_context>

<pallas_src>
import jax
import jax.numpy as jnp
from jax.experimental import pallas as pl
from jax.experimental.pallas import tpu as pltpu


def _gated_conv1x1_kernel(x_ref, s_ref, w_ref, o_ref):
    # x_ref: (Cin, HW)    activations, channel-major (raw NCHW reshape)
    # s_ref: (1,  Cin)    per-channel gate logits (from the (1,C,1,1) tensor)
    # w_ref: (Cout, Cin)  1x1 conv weight in native PyTorch layout
    # o_ref: (Cout, HW)
    gate = jax.nn.sigmoid(s_ref[...])                      # (1, Cin)  EUP
    w_gated = (w_ref[...] * gate).astype(jnp.bfloat16)     # gate the small operand
    x_bf16 = x_ref[...].astype(jnp.bfloat16)
    # bf16 x bf16 -> f32 accumulate on the MXU (== the 1x1 conv)
    o_ref[...] = jnp.dot(
        w_gated, x_bf16, preferred_element_type=jnp.float32
    ).astype(o_ref.dtype)


def sigmoid_mul_conv1x1(x_nchw, s_nc11, w_oi11):
    """x_nchw: (1, Cin, H, W) float32
       s_nc11: (1, Cin, 1, 1) float32
       w_oi11: (Cout, Cin, 1, 1) float32 (PyTorch Conv2d weight layout)
       returns (1, Cout, H, W) float32
    """
    n, c, h, w = x_nchw.shape
    assert n == 1
    cout, cin = w_oi11.shape[0], w_oi11.shape[1]
    assert cin == c
    hw = h * w

    # All three are free layout-preserving reshapes (no transposes).
    x2d = x_nchw.reshape(c, hw)          # (Cin, HW)
    s2d = s_nc11.reshape(1, c)           # (1, Cin)
    w2d = w_oi11.reshape(cout, cin)      # (Cout, Cin) -- native layout

    flops = 2 * hw * cin * cout
    bytes_accessed = 4 * (c * hw + c + cout * cin + cout * hw)

    vmem = pltpu.MemorySpace.VMEM
    out2d = pl.pallas_call(
        _gated_conv1x1_kernel,
        out_shape=jax.ShapeDtypeStruct((cout, hw), x_nchw.dtype),
        in_specs=[
            pl.BlockSpec(memory_space=vmem),   # x2d, whole array in VMEM
            pl.BlockSpec(memory_space=vmem),   # s2d
            pl.BlockSpec(memory_space=vmem),   # w2d
        ],
        out_specs=pl.BlockSpec(memory_space=vmem),
        cost_estimate=pl.CostEstimate(
            flops=flops, transcendentals=c, bytes_accessed=bytes_accessed
        ),
    )(x2d, s2d, w2d)

    # (Cout, HW) -> (1, Cout, H, W): free reshape, no transpose.
    return out2d.reshape(1, cout, h, w)


if __name__ == "__main__":
    key = jax.random.PRNGKey(0)
    k1, k2, k3 = jax.random.split(key, 3)

    # Shapes implied by the module's forward
    C, H, W = 216, 28, 28
    x109 = jax.random.normal(k1, (1, C, H, W), dtype=jnp.float32)
    x113 = jax.random.normal(k2, (1, C, 1, 1), dtype=jnp.float32)
    # Conv2d(216, 216, 1, 1, bias=False) weight, deterministic init
    weight = (
        jax.random.normal(k3, (C, C, 1, 1), dtype=jnp.float32)
        * (1.0 / jnp.sqrt(jnp.float32(C)))
    )

    out = sigmoid_mul_conv1x1(x109, x113, weight)
    out = jax.block_until_ready(out)

    # Reference check in plain JAX (f32 math; kernel uses bf16 operands with
    # f32 accumulation, so tolerance is relaxed accordingly).
    xm_ref = jax.nn.sigmoid(x113) * x109
    ref = jnp.einsum("oi,nihw->nohw", weight.reshape(C, C), xm_ref)
    assert out.shape == (1, C, H, W)
    assert jnp.allclose(out, ref, atol=3e-2, rtol=3e-2)

    print("KERNEL_OK")
</pallas_src>

<mosaic_0001>
module attributes {stable_mosaic.version = 11 : i64} {
  func.func @_gated_conv1x1_kernel(%arg0: memref<216x784xf32, #tpu.memory_space<vmem>>, %arg1: memref<1x216xf32, #tpu.memory_space<vmem>>, %arg2: memref<216x216xf32, #tpu.memory_space<vmem>>, %arg3: memref<216x784xf32, #tpu.memory_space<vmem>>) attributes {dimension_semantics = [], scalar_prefetch = 0 : i64, scratch_operands = 0 : i64, tpu.core_type = #tpu.core_type<tc>} {
    %c0 = arith.constant 0 : index
    %c0_0 = arith.constant 0 : index
    %0 = vector.load %arg1[%c0, %c0_0] : memref<1x216xf32, #tpu.memory_space<vmem>>, vector<1x216xf32>
    %1 = arith.negf %0 : vector<1x216xf32>
    %2 = math.exp %1 : vector<1x216xf32>
    %cst = arith.constant 1.000000e+00 : f32
    %3 = vector.broadcast %cst : f32 to vector<1x216xf32>
    %4 = arith.addf %3, %2 : vector<1x216xf32>
    %5 = arith.divf %3, %4 : vector<1x216xf32>
    %c0_1 = arith.constant 0 : index
    %c0_2 = arith.constant 0 : index
    %6 = vector.load %arg2[%c0_1, %c0_2] : memref<216x216xf32, #tpu.memory_space<vmem>>, vector<216x216xf32>
    %7 = vector.broadcast %5 : vector<1x216xf32> to vector<216x216xf32>
    %8 = arith.mulf %6, %7 : vector<216x216xf32>
    %9 = arith.truncf %8 : vector<216x216xf32> to vector<216x216xbf16>
    %c0_3 = arith.constant 0 : index
    %c0_4 = arith.constant 0 : index
    %10 = vector.load %arg0[%c0_3, %c0_4] : memref<216x784xf32, #tpu.memory_space<vmem>>, vector<216x784xf32>
    %11 = arith.truncf %10 : vector<216x784xf32> to vector<216x784xbf16>
    %cst_5 = arith.constant dense<0.000000e+00> : vector<216x784xf32>
    %12 = tpu.matmul %9, %11, %cst_5 {dimension_numbers = #tpu.dot_dimension_numbers<[1], [0], [0], [1], [0, 0, 1, 1], [], []>} : vector<216x216xbf16>, vector<216x784xbf16>, vector<216x784xf32> -> vector<216x784xf32>
    %c0_6 = arith.constant 0 : index
    %c0_7 = arith.constant 0 : index
    %13 = vector.load %arg3[%c0_6, %c0_7] : memref<216x784xf32, #tpu.memory_space<vmem>>, vector<216x784xf32>
    tpu.vector_store %arg3[%c0_6, %c0_7], %12 {strides = array<i32>} : memref<216x784xf32, #tpu.memory_space<vmem>>, vector<216x784xf32>,
    return
  }
}

</mosaic_0001>

<llo_original>
// kernel: tpu_custom_call.1
$region0: #{tpu_custom_call.1}
  #allocation0 [shape = 'u32[]', space=smem, size = 0x4, offset = 0x4, fixed_abs, tag = 'smem constant byte address 0x4 - core index']
  #allocation1 [shape = 'u32[144,128]{1,0:T(1,128)}', space=vmem, size = 0x12000, scoped, tag = 'internal scratch']
  %s0 = inlined_call_operand.hbm [shape: f32[216,784], index: 0, kind: input, shape index: {}]
  %s1 = inlined_call_operand.vmem [shape: f32[1,216], index: 1, kind: input, shape index: {}]
  %s2 = inlined_call_operand.hbm [shape: f32[216,216], index: 2, kind: input, shape index: {}]
  %s3 = inlined_call_operand.hbm [shape: f32[216,784], index: 3, kind: output, shape index: {}]
  %s4 = sld [smem:[#allocation0]]
  $region30: #{tpu_custom_call.1} parent=0
    _
  %s6 = ssub.s32 1, %s4
  %s7 = scalar_select 0, %s6, %s4
  $region1: #{tpu_custom_call.1} parent=0
    #allocation2 [shape = 'u8[774144]{0}', space=vmem, size = 0xbd000, scoped, tag = 'input window, operand 0, single buffered']
    #allocation3 [shape = 's32[1]{0}', space=sflag, size = 0x4, scoped, tag = 'scoped memory for tpu_custom_call.1']
    #allocation4 [shape = 's32[1]{0}', space=sflag, size = 0x4, scoped, tag = 'scoped memory for tpu_custom_call.1']
    #allocation5 [shape = 'u8[221184]{0}', space=vmem, size = 0x36000, scoped, tag = 'input window, operand 2, single buffered']
    #allocation6 [shape = 's32[1]{0}', space=sflag, size = 0x4, scoped, tag = 'scoped memory for tpu_custom_call.1']
    #allocation7 [shape = 'u8[774144]{0}', space=vmem, size = 0xbd000, scoped, tag = 'output window, operand 0, single buffered']
    %8 = vsyncpa [#allocation3], 0
    %9 = vsyncpa [#allocation6], 0
    %10 = vsyncpa [#allocation4], 0
    // Predicated region
    $region2: #{tpu_custom_call.1} parent=1 // pred_check
      _
    $region3: #{tpu_custom_call.1} parent=1 // pred_check_branch
      %12 = sbr.rel (0) target = $region5
    $region4: #{tpu_custom_call.1} parent=1 // pred_region
      %s14 = ssub.s32 24192, 24192
      %15 = vsyncadd [#allocation3], %s14
      %s16 = sshll.u32 [#allocation2], 4
      %s17 = int_to_ptr.vmem [resolvable:$true] %s16
      %22 = dma.hbm_to_vmem [thread:$0]  %s0, 24192, %s17, [#allocation3], 896, 896, 56
    $region5: #{tpu_custom_call.1} parent=1 // pred_fallthru
      _
    // Predicated region
    $region6: #{tpu_custom_call.1} parent=1 // pred_check
      _
    $region7: #{tpu_custom_call.1} parent=1 // pred_check_branch
      %24 = sbr.rel (0) target = $region9
    $region8: #{tpu_custom_call.1} parent=1 // pred_region
      _
    $region9: #{tpu_custom_call.1} parent=1 // pred_fallthru
      _
    // Predicated region
    $region10: #{tpu_custom_call.1} parent=1 // pred_check
      _
    $region11: #{tpu_custom_call.1} parent=1 // pred_check_branch
      %26 = sbr.rel (0) target = $region13
    $region12: #{tpu_custom_call.1} parent=1 // pred_region
      %s28 = ssub.s32 6912, 6912
      %29 = vsyncadd [#allocation6], %s28
      %s30 = sshll.u32 [#allocation5], 4
      %s31 = int_to_ptr.vmem [resolvable:$true] %s30
      %36 = dma.hbm_to_vmem [thread:$0]  %s2, 6912, %s31, [#allocation6], 256, 256, 16
    $region13: #{tpu_custom_call.1} parent=1 // pred_fallthru
      _
    // Predicated region
    $region14: #{tpu_custom_call.1} parent=1 // pred_check
      _
    $region15: #{tpu_custom_call.1} parent=1 // pred_check_branch
      %38 = sbr.rel (0) target = $region17
    $region16: #{tpu_custom_call.1} parent=1 // pred_region
      %39 = dma.done [#allocation3], 24192
    $region17: #{tpu_custom_call.1} parent=1 // pred_fallthru
      _
    // Predicated region
    $region18: #{tpu_custom_call.1} parent=1 // pred_check
      _
    $region19: #{tpu_custom_call.1} parent=1 // pred_check_branch
      %41 = sbr.rel (0) target = $region21
    $region20: #{tpu_custom_call.1} parent=1 // pred_region
      %42 = dma.done [#allocation6], 6912
    $region21: #{tpu_custom_call.1} parent=1 // pred_fallthru
      _
    %v44 = vld [vmem:[%s1] sm:$0x3]
    %v45 = vxor.u32 %v44, 2147483648
    %v46 = vmul.f32 %v45, 1.442695
    %v47 = vpow.pop %v46
    %v48 = vadd.f32 %v47, 1.0
    %v49 = vrcp.pop %v48
    %v50 = vmul.f32 1.0, %v49
    %v51 = vld [vmem:[#allocation5] sm:$0xff]
    %v52 = vld [vmem:[#allocation5 + $0x8] sm:$0xff]
    %v53 = vld [vmem:[#allocation5 + $0x10] sm:$0xff]
    %v54 = vld [vmem:[#allocation5 + $0x18] sm:$0xff]
    %v55 = vld [vmem:[#allocation5 + $0x20] sm:$0xff]
    %v56 = vld [vmem:[#allocation5 + $0x28] sm:$0xff]
    %v57 = vld [vmem:[#allocation5 + $0x30] sm:$0xff]
    %v58 = vld [vmem:[#allocation5 + $0x38] sm:$0xff]
    %v59 = vld [vmem:[#allocation5 + $0x40] sm:$0xff]
    %v60 = vld [vmem:[#allocation5 + $0x48] sm:$0xff]
    %v61 = vld [vmem:[#allocation5 + $0x50] sm:$0xff]
    %v62 = vld [vmem:[#allocation5 + $0x58] sm:$0xff]
    %v63 = vld [vmem:[#allocation5 + $0x60] sm:$0xff]
    %v64 = vld [vmem:[#allocation5 + $0x68] sm:$0xff]
    %v65 = vld [vmem:[#allocation5 + $0x70] sm:$0xff]
    %v66 = vld [vmem:[#allocation5 + $0x78] sm:$0xff]
    %v67 = vld [vmem:[#allocation5 + $0x80] sm:$0xff]
    %v68 = vld [vmem:[#allocation5 + $0x88] sm:$0xff]
    %v69 = vld [vmem:[#allocation5 + $0x90] sm:$0xff]
    %v70 = vld [vmem:[#allocation5 + $0x98] sm:$0xff]
    %v71 = vld [vmem:[#allocation5 + $0xa0] sm:$0xff]
    %v72 = vld [vmem:[#allocation5 + $0xa8] sm:$0xff]
    %v73 = vld [vmem:[#allocation5 + $0xb0] sm:$0xff]
    %v74 = vld [vmem:[#allocation5 + $0xb8] sm:$0xff]
    %v75 = vld [vmem:[#allocation5 + $0xc0] sm:$0xff]
    %v76 = vld [vmem:[#allocation5 + $0xc8] sm:$0xff]
    %v77 = vld [vmem:[#allocation5 + $0xd0] sm:$0xff]
    %v78 = vld [vmem:[#allocation5 + $0xd8] sm:$0xff]
    %v79 = vld [vmem:[#allocation5 + $0xe0] sm:$0xff]
    %v80 = vld [vmem:[#allocation5 + $0xe8] sm:$0xff]
    %v81 = vld [vmem:[#allocation5 + $0xf0] sm:$0xff]
    %v82 = vld [vmem:[#allocation5 + $0xf8] sm:$0xff]
    %v83 = vld [vmem:[#allocation5 + $0x100] sm:$0xff]
    %v84 = vld [vmem:[#allocation5 + $0x108] sm:$0xff]
    %v85 = vld [vmem:[#allocation5 + $0x110] sm:$0xff]
    %v86 = vld [vmem:[#allocation5 + $0x118] sm:$0xff]
    %v87 = vld [vmem:[#allocation5 + $0x120] sm:$0xff]
    %v88 = vld [vmem:[#allocation5 + $0x128] sm:$0xff]
    %v89 = vld [vmem:[#allocation5 + $0x130] sm:$0xff]
    %v90 = vld [vmem:[#allocation5 + $0x138] sm:$0xff]
    %v91 = vld [vmem:[#allocation5 + $0x140] sm:$0xff]
    %v92 = vld [vmem:[#allocation5 + $0x148] sm:$0xff]
    %v93 = vld [vmem:[#allocation5 + $0x150] sm:$0xff]
    %v94 = vld [vmem:[#allocation5 + $0x158] sm:$0xff]
    %v95 = vld [vmem:[#allocation5 + $0x160] sm:$0xff]
    %v96 = vld [vmem:[#allocation5 + $0x168] sm:$0xff]
    %v97 = vld [vmem:[#allocation5 + $0x170] sm:$0xff]
    %v98 = vld [vmem:[#allocation5 + $0x178] sm:$0xff]
    %v99 = vld [vmem:[#allocation5 + $0x180] sm:$0xff]
    %v100 = vld [vmem:[#allocation5 + $0x188] sm:$0xff]
    %v101 = vld [vmem:[#allocation5 + $0x190] sm:$0xff]
    %v102 = vld [vmem:[#allocation5 + $0x198] sm:$0xff]
    %v103 = vld [vmem:[#allocation5 + $0x1a0] sm:$0xff]
    %v104 = vld [vmem:[#allocation5 + $0x1a8] sm:$0xff]
    %v106 = vlaneseq
    %v107 = vshrl.u32 %v106, 7
    %v108 = vsub.s32 0, %v107
    %v109 = vrot.slane %v50, %v108
    %v110 = vlaneseq
    %v111 = vshrl.u32 %v110, 7
    %v112 = vsub.s32 1, %v111
    %v113 = vrot.slane %v50, %v112
    %v116 = vmul.f32 %v51, %v109
    %v117 = vmul.f32 %v52, %v113
    %v118 = vmul.f32 %v53, %v109
    %v119 = vmul.f32 %v54, %v113
    %v120 = vmul.f32 %v55, %v109
    %v121 = vmul.f32 %v56, %v113
    %v122 = vmul.f32 %v57, %v109
    %v123 = vmul.f32 %v58, %v113
    %v124 = vmul.f32 %v59, %v109
    %v125 = vmul.f32 %v60, %v113
    %v126 = vmul.f32 %v61, %v109
    %v127 = vmul.f32 %v62, %v113
    %v128 = vmul.f32 %v63, %v109
    %v129 = vmul.f32 %v64, %v113
    %v130 = vmul.f32 %v65, %v109
    %v131 = vmul.f32 %v66, %v113
    %v132 = vmul.f32 %v67, %v109
    %v133 = vmul.f32 %v68, %v113
    %v134 = vmul.f32 %v69, %v109
    %v135 = vmul.f32 %v70, %v113
    %v136 = vmul.f32 %v71, %v109
    %v137 = vmul.f32 %v72, %v113
    %v138 = vmul.f32 %v73, %v109
    %v139 = vmul.f32 %v74, %v113
    %v140 = vmul.f32 %v75, %v109
    %v141 = vmul.f32 %v76, %v113
    %v142 = vmul.f32 %v77, %v109
    %v143 = vmul.f32 %v78, %v113
    %v144 = vmul.f32 %v79, %v109
    %v145 = vmul.f32 %v80, %v113
    %v146 = vmul.f32 %v81, %v109
    %v147 = vmul.f32 %v82, %v113
    %v148 = vmul.f32 %v83, %v109
    %v149 = vmul.f32 %v84, %v113
    %v150 = vmul.f32 %v85, %v109
    %v151 = vmul.f32 %v86, %v113
    %v152 = vmul.f32 %v87, %v109
    %v153 = vmul.f32 %v88, %v113
    %v154 = vmul.f32 %v89, %v109
    %v155 = vmul.f32 %v90, %v113
    %v156 = vmul.f32 %v91, %v109
    %v157 = vmul.f32 %v92, %v113
    %v158 = vmul.f32 %v93, %v109
    %v159 = vmul.f32 %v94, %v113
    %v160 = vmul.f32 %v95, %v109
    %v161 = vmul.f32 %v96, %v113
    %v162 = vmul.f32 %v97, %v109
    %v163 = vmul.f32 %v98, %v113
    %v164 = vmul.f32 %v99, %v109
    %v165 = vmul.f32 %v100, %v113
    %v166 = vmul.f32 %v101, %v109
    %v167 = vmul.f32 %v102, %v113
    %v168 = vmul.f32 %v103, %v109
    %v169 = vmul.f32 %v104, %v113
    %v170 = vpack.c.bf16 %v118, %v116
    %v171 = vpack.c.bf16 %v119, %v117
    %v172 = vpack.c.bf16 %v122, %v120
    %v173 = vpack.c.bf16 %v123, %v121
    %v174 = vpack.c.bf16 %v126, %v124
    %v175 = vpack.c.bf16 %v127, %v125
    %v176 = vpack.c.bf16 %v130, %v128
    %v177 = vpack.c.bf16 %v131, %v129
    %v178 = vpack.c.bf16 %v134, %v132
    %v179 = vpack.c.bf16 %v135, %v133
    %v180 = vpack.c.bf16 %v138, %v136
    %v181 = vpack.c.bf16 %v139, %v137
    %v182 = vpack.c.bf16 %v142, %v140
    %v183 = vpack.c.bf16 %v143, %v141
    %v184 = vpack.c.bf16 %v146, %v144
    %v185 = vpack.c.bf16 %v147, %v145
    %v186 = vpack.c.bf16 %v150, %v148
    %v187 = vpack.c.bf16 %v151, %v149
    %v188 = vpack.c.bf16 %v154, %v152
    %v189 = vpack.c.bf16 %v155, %v153
    %v190 = vpack.c.bf16 %v158, %v156
    %v191 = vpack.c.bf16 %v159, %v157
    %v192 = vpack.c.bf16 %v162, %v160
    %v193 = vpack.c.bf16 %v163, %v161
    %v194 = vpack.c.bf16 %v166, %v164
    %v195 = vpack.c.bf16 %v167, %v165
    %v196 = vpack.c.bf16 %v168, %v168
    %v197 = vpack.c.bf16 %v169, %v169
    %v198 = vld [vmem:[#allocation2] sm:$0xff]
    %v199 = vld [vmem:[#allocation2 + $0x8] sm:$0xff]
    %v200 = vld [vmem:[#allocation2 + $0x10] sm:$0xff]
    %v201 = vld [vmem:[#allocation2 + $0x18] sm:$0xff]
    %v202 = vld [vmem:[#allocation2 + $0x20] sm:$0xff]
    %v203 = vld [vmem:[#allocation2 + $0x28] sm:$0xff]
    %v204 = vld [vmem:[#allocation2 + $0x30] sm:$0xff]
    %v205 = vld [vmem:[#allocation2 + $0x38] sm:$0xff]
    %v206 = vld [vmem:[#allocation2 + $0x40] sm:$0xff]
    %v207 = vld [vmem:[#allocation2 + $0x48] sm:$0xff]
    %v208 = vld [vmem:[#allocation2 + $0x50] sm:$0xff]
    %v209 = vld [vmem:[#allocation2 + $0x58] sm:$0xff]
    %v210 = vld [vmem:[#allocation2 + $0x60] sm:$0xff]
    %v211 = vld [vmem:[#allocation2 + $0x68] sm:$0xff]
    %v212 = vld [vmem:[#allocation2 + $0x70] sm:$0xff]
    %v213 = vld [vmem:[#allocation2 + $0x78] sm:$0xff]
    %v214 = vld [vmem:[#allocation2 + $0x80] sm:$0xff]
    %v215 = vld [vmem:[#allocation2 + $0x88] sm:$0xff]
    %v216 = vld [vmem:[#allocation2 + $0x90] sm:$0xff]
    %v217 = vld [vmem:[#allocation2 + $0x98] sm:$0xff]
    %v218 = vld [vmem:[#allocation2 + $0xa0] sm:$0xff]
    %v219 = vld [vmem:[#allocation2 + $0xa8] sm:$0xff]
    %v220 = vld [vmem:[#allocation2 + $0xb0] sm:$0xff]
    %v221 = vld [vmem:[#allocation2 + $0xb8] sm:$0xff]
    %v222 = vld [vmem:[#allocation2 + $0xc0] sm:$0xff]
    %v223 = vld [vmem:[#allocation2 + $0xc8] sm:$0xff]
    %v224 = vld [vmem:[#allocation2 + $0xd0] sm:$0xff]
    %v225 = vld [vmem:[#allocation2 + $0xd8] sm:$0xff]
    %v226 = vld [vmem:[#allocation2 + $0xe0] sm:$0xff]
    %v227 = vld [vmem:[#allocation2 + $0xe8] sm:$0xff]
    %v228 = vld [vmem:[#allocation2 + $0xf0] sm:$0xff]
    %v229 = vld [vmem:[#allocation2 + $0xf8] sm:$0xff]
    %v230 = vld [vmem:[#allocation2 + $0x100] sm:$0xff]
    %v231 = vld [vmem:[#allocation2 + $0x108] sm:$0xff]
    %v232 = vld [vmem:[#allocation2 + $0x110] sm:$0xff]
    %v233 = vld [vmem:[#allocation2 + $0x118] sm:$0xff]
    %v234 = vld [vmem:[#allocation2 + $0x120] sm:$0xff]
    %v235 = vld [vmem:[#allocation2 + $0x128] sm:$0xff]
    %v236 = vld [vmem:[#allocation2 + $0x130] sm:$0xff]
    %v237 = vld [vmem:[#allocation2 + $0x138] sm:$0xff]
    %v238 = vld [vmem:[#allocation2 + $0x140] sm:$0xff]
    %v239 = vld [vmem:[#allocation2 + $0x148] sm:$0xff]
    %v240 = vld [vmem:[#allocation2 + $0x150] sm:$0xff]
    %v241 = vld [vmem:[#allocation2 + $0x158] sm:$0xff]
    %v242 = vld [vmem:[#allocation2 + $0x160] sm:$0xff]
    %v243 = vld [vmem:[#allocation2 + $0x168] sm:$0xff]
    %v244 = vld [vmem:[#allocation2 + $0x170] sm:$0xff]
    %v245 = vld [vmem:[#allocation2 + $0x178] sm:$0xff]
    %v246 = vld [vmem:[#allocation2 + $0x180] sm:$0xff]
    %v247 = vld [vmem:[#allocation2 + $0x188] sm:$0xff]
    %v248 = vld [vmem:[#allocation2 + $0x190] sm:$0xff]
    %v249 = vld [vmem:[#allocation2 + $0x198] sm:$0xff]
    %v250 = vld [vmem:[#allocation2 + $0x1a0] sm:$0xff]
    %v251 = vld [vmem:[#allocation2 + $0x1a8] sm:$0xff]
    %v252 = vld [vmem:[#allocation2 + $0x1b0] sm:$0xff]
    %v253 = vld [vmem:[#allocation2 + $0x1b8] sm:$0xff]
    %v254 = vld [vmem:[#allocation2 + $0x1c0] sm:$0xff]
    %v255 = vld [vmem:[#allocation2 + $0x1c8] sm:$0xff]
    %v256 = vld [vmem:[#allocation2 + $0x1d0] sm:$0xff]
    %v257 = vld [vmem:[#allocation2 + $0x1d8] sm:$0xff]
    %v258 = vld [vmem:[#allocation2 + $0x1e0] sm:$0xff]
    %v259 = vld [vmem:[#allocation2 + $0x1e8] sm:$0xff]
    %v260 = vld [vmem:[#allocation2 + $0x1f0] sm:$0xff]
    %v261 = vld [vmem:[#allocation2 + $0x1f8] sm:$0xff]
    %v262 = vld [vmem:[#allocation2 + $0x200] sm:$0xff]
    %v263 = vld [vmem:[#allocation2 + $0x208] sm:$0xff]
    %v264 = vld [vmem:[#allocation2 + $0x210] sm:$0xff]
    %v265 = vld [vmem:[#allocation2 + $0x218] sm:$0xff]
    %v266 = vld [vmem:[#allocation2 + $0x220] sm:$0xff]
    %v267 = vld [vmem:[#allocation2 + $0x228] sm:$0xff]
    %v268 = vld [vmem:[#allocation2 + $0x230] sm:$0xff]
    %v269 = vld [vmem:[#allocation2 + $0x238] sm:$0xff]
    %v270 = vld [vmem:[#allocation2 + $0x240] sm:$0xff]
    %v271 = vld [vmem:[#allocation2 + $0x248] sm:$0xff]
    %v272 = vld [vmem:[#allocation2 + $0x250] sm:$0xff]
    %v273 = vld [vmem:[#allocation2 + $0x258] sm:$0xff]
    %v274 = vld [vmem:[#allocation2 + $0x260] sm:$0xff]
    %v275 = vld [vmem:[#allocation2 + $0x268] sm:$0xff]
    %v276 = vld [vmem:[#allocation2 + $0x270] sm:$0xff]
    %v277 = vld [vmem:[#allocation2 + $0x278] sm:$0xff]
    %v278 = vld [vmem:[#allocation2 + $0x280] sm:$0xff]
    %v279 = vld [vmem:[#allocation2 + $0x288] sm:$0xff]
    %v280 = vld [vmem:[#allocation2 + $0x290] sm:$0xff]
    %v281 = vld [vmem:[#allocation2 + $0x298] sm:$0xff]
    %v282 = vld [vmem:[#allocation2 + $0x2a0] sm:$0xff]
    %v283 = vld [vmem:[#allocation2 + $0x2a8] sm:$0xff]
    %v284 = vld [vmem:[#allocation2 + $0x2b0] sm:$0xff]
    %v285 = vld [vmem:[#allocation2 + $0x2b8] sm:$0xff]
    %v286 = vld [vmem:[#allocation2 + $0x2c0] sm:$0xff]
    %v287 = vld [vmem:[#allocation2 + $0x2c8] sm:$0xff]
    %v288 = vld [vmem:[#allocation2 + $0x2d0] sm:$0xff]
    %v289 = vld [vmem:[#allocation2 + $0x2d8] sm:$0xff]
    %v290 = vld [vmem:[#allocation2 + $0x2e0] sm:$0xff]
    %v291 = vld [vmem:[#allocation2 + $0x2e8] sm:$0xff]
    %v292 = vld [vmem:[#allocation2 + $0x2f0] sm:$0xff]
    %v293 = vld [vmem:[#allocation2 + $0x2f8] sm:$0xff]
    %v294 = vld [vmem:[#allocation2 + $0x300] sm:$0xff]
    %v295 = vld [vmem:[#allocation2 + $0x308] sm:$0xff]
    %v296 = vld [vmem:[#allocation2 + $0x310] sm:$0xff]
    %v297 = vld [vmem:[#allocation2 + $0x318] sm:$0xff]
    %v298 = vld [vmem:[#allocation2 + $0x320] sm:$0xff]
    %v299 = vld [vmem:[#allocation2 + $0x328] sm:$0xff]
    %v300 = vld [vmem:[#allocation2 + $0x330] sm:$0xff]
    %v301 = vld [vmem:[#allocation2 + $0x338] sm:$0xff]
    %v302 = vld [vmem:[#allocation2 + $0x340] sm:$0xff]
    %v303 = vld [vmem:[#allocation2 + $0x348] sm:$0xff]
    %v304 = vld [vmem:[#allocation2 + $0x350] sm:$0xff]
    %v305 = vld [vmem:[#allocation2 + $0x358] sm:$0xff]
    %v306 = vld [vmem:[#allocation2 + $0x360] sm:$0xff]
    %v307 = vld [vmem:[#allocation2 + $0x368] sm:$0xff]
    %v308 = vld [vmem:[#allocation2 + $0x370] sm:$0xff]
    %v309 = vld [vmem:[#allocation2 + $0x378] sm:$0xff]
    %v310 = vld [vmem:[#allocation2 + $0x380] sm:$0xff]
    %v311 = vld [vmem:[#allocation2 + $0x388] sm:$0xff]
    %v312 = vld [vmem:[#allocation2 + $0x390] sm:$0xff]
    %v313 = vld [vmem:[#allocation2 + $0x398] sm:$0xff]
    %v314 = vld [vmem:[#allocation2 + $0x3a0] sm:$0xff]
    %v315 = vld [vmem:[#allocation2 + $0x3a8] sm:$0xff]
    %v316 = vld [vmem:[#allocation2 + $0x3b0] sm:$0xff]
    %v317 = vld [vmem:[#allocation2 + $0x3b8] sm:$0xff]
    %v318 = vld [vmem:[#allocation2 + $0x3c0] sm:$0xff]
    %v319 = vld [vmem:[#allocation2 + $0x3c8] sm:$0xff]
    %v320 = vld [vmem:[#allocation2 + $0x3d0] sm:$0xff]
    %v321 = vld [vmem:[#allocation2 + $0x3d8] sm:$0xff]
    %v322 = vld [vmem:[#allocation2 + $0x3e0] sm:$0xff]
    %v323 = vld [vmem:[#allocation2 + $0x3e8] sm:$0xff]
    %v324 = vld [vmem:[#allocation2 + $0x3f0] sm:$0xff]
    %v325 = vld [vmem:[#allocation2 + $0x3f8] sm:$0xff]
    %v326 = vld [vmem:[#allocation2 + $0x400] sm:$0xff]
    %v327 = vld [vmem:[#allocation2 + $0x408] sm:$0xff]
    %v328 = vld [vmem:[#allocation2 + $0x410] sm:$0xff]
    %v329 = vld [vmem:[#allocation2 + $0x418] sm:$0xff]
    %v330 = vld [vmem:[#allocation2 + $0x420] sm:$0xff]
    %v331 = vld [vmem:[#allocation2 + $0x428] sm:$0xff]
    %v332 = vld [vmem:[#allocation2 + $0x430] sm:$0xff]
    %v333 = vld [vmem:[#allocation2 + $0x438] sm:$0xff]
    %v334 = vld [vmem:[#allocation2 + $0x440] sm:$0xff]
    %v335 = vld [vmem:[#allocation2 + $0x448] sm:$0xff]
    %v336 = vld [vmem:[#allocation2 + $0x450] sm:$0xff]
    %v337 = vld [vmem:[#allocation2 + $0x458] sm:$0xff]
    %v338 = vld [vmem:[#allocation2 + $0x460] sm:$0xff]
    %v339 = vld [vmem:[#allocation2 + $0x468] sm:$0xff]
    %v340 = vld [vmem:[#allocation2 + $0x470] sm:$0xff]
    %v341 = vld [vmem:[#allocation2 + $0x478] sm:$0xff]
    %v342 = vld [vmem:[#allocation2 + $0x480] sm:$0xff]
    %v343 = vld [vmem:[#allocation2 + $0x488] sm:$0xff]
    %v344 = vld [vmem:[#allocation2 + $0x490] sm:$0xff]
    %v345 = vld [vmem:[#allocation2 + $0x498] sm:$0xff]
    %v346 = vld [vmem:[#allocation2 + $0x4a0] sm:$0xff]
    %v347 = vld [vmem:[#allocation2 + $0x4a8] sm:$0xff]
    %v348 = vld [vmem:[#allocation2 + $0x4b0] sm:$0xff]
    %v349 = vld [vmem:[#allocation2 + $0x4b8] sm:$0xff]
    %v350 = vld [vmem:[#allocation2 + $0x4c0] sm:$0xff]
    %v351 = vld [vmem:[#allocation2 + $0x4c8] sm:$0xff]
    %v352 = vld [vmem:[#allocation2 + $0x4d0] sm:$0xff]
    %v353 = vld [vmem:[#allocation2 + $0x4d8] sm:$0xff]
    %v354 = vld [vmem:[#allocation2 + $0x4e0] sm:$0xff]
    %v355 = vld [vmem:[#allocation2 + $0x4e8] sm:$0xff]
    %v356 = vld [vmem:[#allocation2 + $0x4f0] sm:$0xff]
    %v357 = vld [vmem:[#allocation2 + $0x4f8] sm:$0xff]
    %v358 = vld [vmem:[#allocation2 + $0x500] sm:$0xff]
    %v359 = vld [vmem:[#allocation2 + $0x508] sm:$0xff]
    %v360 = vld [vmem:[#allocation2 + $0x510] sm:$0xff]
    %v361 = vld [vmem:[#allocation2 + $0x518] sm:$0xff]
    %v362 = vld [vmem:[#allocation2 + $0x520] sm:$0xff]
    %v363 = vld [vmem:[#allocation2 + $0x528] sm:$0xff]
    %v364 = vld [vmem:[#allocation2 + $0x530] sm:$0xff]
    %v365 = vld [vmem:[#allocation2 + $0x538] sm:$0xff]
    %v366 = vld [vmem:[#allocation2 + $0x540] sm:$0xff]
    %v367 = vld [vmem:[#allocation2 + $0x548] sm:$0xff]
    %v368 = vld [vmem:[#allocation2 + $0x550] sm:$0xff]
    %v369 = vld [vmem:[#allocation2 + $0x558] sm:$0xff]
    %v370 = vld [vmem:[#allocation2 + $0x560] sm:$0xff]
    %v371 = vld [vmem:[#allocation2 + $0x568] sm:$0xff]
    %v372 = vld [vmem:[#allocation2 + $0x570] sm:$0xff]
    %v373 = vld [vmem:[#allocation2 + $0x578] sm:$0xff]
    %v374 = vld [vmem:[#allocation2 + $0x580] sm:$0xff]
    %v375 = vld [vmem:[#allocation2 + $0x588] sm:$0xff]
    %v376 = vld [vmem:[#allocation2 + $0x590] sm:$0xff]
    %v377 = vld [vmem:[#allocation2 + $0x598] sm:$0xff]
    %v378 = vld [vmem:[#allocation2 + $0x5a0] sm:$0xff]
    %v379 = vld [vmem:[#allocation2 + $0x5a8] sm:$0xff]
    %v380 = vld [vmem:[#allocation2 + $0x5b0] sm:$0xff]
    %v381 = vld [vmem:[#allocation2 + $0x5b8] sm:$0xff]
    %v382 = vld [vmem:[#allocation2 + $0x5c0] sm:$0xff]
    %v383 = vld [vmem:[#allocation2 + $0x5c8] sm:$0xff]
    %v384 = vld [vmem:[#allocation2 + $0x5d0] sm:$0xff]
    %v385 = vld [vmem:[#allocation2 + $0x5d8] sm:$0xff]
    %v386 = vld [vmem:[#allocation2 + $0x5e0] sm:$0xff]
    %v387 = vpack.c.bf16 %v205, %v198
    %v388 = vpack.c.bf16 %v206, %v199
    %v389 = vpack.c.bf16 %v207, %v200
    %v390 = vpack.c.bf16 %v208, %v201
    %v391 = vpack.c.bf16 %v209, %v202
    %v392 = vpack.c.bf16 %v210, %v203
    %v393 = vpack.c.bf16 %v211, %v204
    %v394 = vpack.c.bf16 %v219, %v212
    %v395 = vpack.c.bf16 %v220, %v213
    %v396 = vpack.c.bf16 %v221, %v214
    %v397 = vpack.c.bf16 %v222, %v215
    %v398 = vpack.c.bf16 %v223, %v216
    %v399 = vpack.c.bf16 %v224, %v217
    %v400 = vpack.c.bf16 %v225, %v218
    %v401 = vpack.c.bf16 %v233, %v226
    %v402 = vpack.c.bf16 %v234, %v227
    %v403 = vpack.c.bf16 %v235, %v228
    %v404 = vpack.c.bf16 %v236, %v229
    %v405 = vpack.c.bf16 %v237, %v230
    %v406 = vpack.c.bf16 %v238, %v231
    %v407 = vpack.c.bf16 %v239, %v232
    %v408 = vpack.c.bf16 %v247, %v240
    %v409 = vpack.c.bf16 %v248, %v241
    %v410 = vpack.c.bf16 %v249, %v242
    %v411 = vpack.c.bf16 %v250, %v243
    %v412 = vpack.c.bf16 %v251, %v244
    %v413 = vpack.c.bf16 %v252, %v245
    %v414 = vpack.c.bf16 %v253, %v246
    %v415 = vpack.c.bf16 %v261, %v254
    %v416 = vpack.c.bf16 %v262, %v255
    %v417 = vpack.c.bf16 %v263, %v256
    %v418 = vpack.c.bf16 %v264, %v257
    %v419 = vpack.c.bf16 %v265, %v258
    %v420 = vpack.c.bf16 %v266, %v259
    %v421 = vpack.c.bf16 %v267, %v260
    %v422 = vpack.c.bf16 %v275, %v268
    %v423 = vpack.c.bf16 %v276, %v269
    %v424 = vpack.c.bf16 %v277, %v270
    %v425 = vpack.c.bf16 %v278, %v271
    %v426 = vpack.c.bf16 %v279, %v272
    %v427 = vpack.c.bf16 %v280, %v273
    %v428 = vpack.c.bf16 %v281, %v274
    %v429 = vpack.c.bf16 %v289, %v282
    %v430 = vpack.c.bf16 %v290, %v283
    %v431 = vpack.c.bf16 %v291, %v284
    %v432 = vpack.c.bf16 %v292, %v285
    %v433 = vpack.c.bf16 %v293, %v286
    %v434 = vpack.c.bf16 %v294, %v287
    %v435 = vpack.c.bf16 %v295, %v288
    %v436 = vpack.c.bf16 %v303, %v296
    %v437 = vpack.c.bf16 %v304, %v297
    %v438 = vpack.c.bf16 %v305, %v298
    %v439 = vpack.c.bf16 %v306, %v299
    %v440 = vpack.c.bf16 %v307, %v300
    %v441 = vpack.c.bf16 %v308, %v301
    %v442 = vpack.c.bf16 %v309, %v302
    %v443 = vpack.c.bf16 %v317, %v310
    %v444 = vpack.c.bf16 %v318, %v311
    %v445 = vpack.c.bf16 %v319, %v312
    %v446 = vpack.c.bf16 %v320, %v313
    %v447 = vpack.c.bf16 %v321, %v314
    %v448 = vpack.c.bf16 %v322, %v315
    %v449 = vpack.c.bf16 %v323, %v316
    %v450 = vpack.c.bf16 %v331, %v324
    %v451 = vpack.c.bf16 %v332, %v325
    %v452 = vpack.c.bf16 %v333, %v326
    %v453 = vpack.c.bf16 %v334, %v327
    %v454 = vpack.c.bf16 %v335, %v328
    %v455 = vpack.c.bf16 %v336, %v329
    %v456 = vpack.c.bf16 %v337, %v330
    %v457 = vpack.c.bf16 %v345, %v338
    %v458 = vpack.c.bf16 %v346, %v339
    %v459 = vpack.c.bf16 %v347, %v340
    %v460 = vpack.c.bf16 %v348, %v341
    %v461 = vpack.c.bf16 %v349, %v342
    %v462 = vpack.c.bf16 %v350, %v343
    %v463 = vpack.c.bf16 %v351, %v344
    %v464 = vpack.c.bf16 %v359, %v352
    %v465 = vpack.c.bf16 %v360, %v353
    %v466 = vpack.c.bf16 %v361, %v354
    %v467 = vpack.c.bf16 %v362, %v355
    %v468 = vpack.c.bf16 %v363, %v356
    %v469 = vpack.c.bf16 %v364, %v357
    %v470 = vpack.c.bf16 %v365, %v358
    %v471 = vpack.c.bf16 %v373, %v366
    %v472 = vpack.c.bf16 %v374, %v367
    %v473 = vpack.c.bf16 %v375, %v368
    %v474 = vpack.c.bf16 %v376, %v369
    %v475 = vpack.c.bf16 %v377, %v370
    %v476 = vpack.c.bf16 %v378, %v371
    %v477 = vpack.c.bf16 %v379, %v372
    %v478 = vpack.c.bf16 %v380, %v380
    %v479 = vpack.c.bf16 %v381, %v381
    %v480 = vpack.c.bf16 %v382, %v382
    %v481 = vpack.c.bf16 %v383, %v383
    %v482 = vpack.c.bf16 %v384, %v384
    %v483 = vpack.c.bf16 %v385, %v385
    %v484 = vpack.c.bf16 %v386, %v386
    %vm485 = vcmask 719872
    %v487 = vsel %vm485, %v171, 0
    %v490 = vsel %vm485, %v173, 0
    %v493 = vsel %vm485, %v175, 0
    %v496 = vsel %vm485, %v177, 0
    %v499 = vsel %vm485, %v179, 0
    %v502 = vsel %vm485, %v181, 0
    %v505 = vsel %vm485, %v183, 0
    %v508 = vsel %vm485, %v185, 0
    %v511 = vsel %vm485, %v187, 0
    %v514 = vsel %vm485, %v189, 0
    %v517 = vsel %vm485, %v191, 0
    %v520 = vsel %vm485, %v193, 0
    %v523 = vsel %vm485, %v195, 0
    %v526 = vsel %vm485, %v197, 0
    %vm528 = vcmask 1043456
    %v530 = vsel %vm528, %v478, 0
    %v533 = vsel %vm528, %v479, 0
    %v536 = vsel %vm528, %v480, 0
    %v539 = vsel %vm528, %v481, 0
    %v542 = vsel %vm528, %v482, 0
    %v545 = vsel %vm528, %v483, 0
    %v548 = vsel %vm528, %v484, 0
    %550 = vmatprep.subr.bf16.mxu0 %v388
    %551 = vmatpush1.bf16.msra.mxu0 %v387
    %552 = vmatprep.subr.bf16.mxu0 %v395
    %553 = vmatpush1.bf16.msra.mxu0 %v394
    %554 = vmatprep.subr.bf16.mxu0 %v402
    %555 = vmatpush1.bf16.msra.mxu0 %v401
    %556 = vmatprep.subr.bf16.mxu0 %v409
    %557 = vmatpush1.bf16.msra.mxu0 %v408
    %558 = vmatprep.subr.bf16.mxu0 %v416
    %559 = vmatpush1.bf16.msra.mxu0 %v415
    %560 = vmatprep.subr.bf16.mxu0 %v423
    %561 = vmatpush1.bf16.msra.mxu0 %v422
    %562 = vmatprep.subr.bf16.mxu0 %v430
    %563 = vmatpush1.bf16.msra.mxu0 %v429
    %564 = vmatprep.subr.bf16.mxu0 %v437
    %565 = vmatpush1.bf16.msra.mxu0 %v436
    %566 = vmatprep.subr.bf16.mxu0 %v444
    %567 = vmatpush1.bf16.msra.mxu0 %v443
    %568 = vmatprep.subr.bf16.mxu0 %v451
    %569 = vmatpush1.bf16.msra.mxu0 %v450
    %570 = vmatprep.subr.bf16.mxu0 %v458
    %571 = vmatpush1.bf16.msra.mxu0 %v457
    %572 = vmatprep.subr.bf16.mxu0 %v465
    %573 = vmatpush1.bf16.msra.mxu0 %v464
    %574 = vmatprep.subr.bf16.mxu0 %v472
    %575 = vmatpush1.bf16.msra.mxu0 %v471
    %576 = vmatprep.subr.bf16.mxu0 %v533
    %577 = vmatpush1.bf16.msra.mxu0 %v530
    %578 = vmatprep.subr.bf16.mxu0 0
    %579 = vmatpush1.bf16.msra.mxu0 0
    %580 = vmatprep.subr.bf16.mxu0 0
    %581 = vmatpush1.bf16.msra.mxu0 0
    %582 = vmatprep.mubr.bf16.mxu0 %v487
    %583 = vmatmul.mubr.bf16.gmra.mrb[0].mxu0 %v170
    %v584 = vpop.f32.mrb[0].mxu0
    %v585 = vadd.f32 0.0, %v584
    %v586 = vpop.f32.mrb[0].mxu0
    %v587 = vadd.f32 0.0, %v586
    %v588 = vpop.f32.mrb[0].mxu0
    %v589 = vadd.f32 0.0, %v588
    %v590 = vpop.f32.mrb[0].mxu0
    %v591 = vadd.f32 0.0, %v590
    %592 = vmatprep.mubr.bf16.mxu0 %v490
    %593 = vmatmul.mubr.bf16.gmra.mrb[0].mxu0 %v172
    %v594 = vpop.f32.mrb[0].mxu0
    %v595 = vadd.f32 0.0, %v594
    %v596 = vpop.f32.mrb[0].mxu0
    %v597 = vadd.f32 0.0, %v596
    %v598 = vpop.f32.mrb[0].mxu0
    %v599 = vadd.f32 0.0, %v598
    %v600 = vpop.f32.mrb[0].mxu0
    %v601 = vadd.f32 0.0, %v600
    %602 = vmatprep.mubr.bf16.mxu0 %v493
    %603 = vmatmul.mubr.bf16.gmra.mrb[0].mxu0 %v174
    %v604 = vpop.f32.mrb[0].mxu0
    %v605 = vadd.f32 0.0, %v604
    %v606 = vpop.f32.mrb[0].mxu0
    %v607 = vadd.f32 0.0, %v606
    %v608 = vpop.f32.mrb[0].mxu0
    %v609 = vadd.f32 0.0, %v608
    %v610 = vpop.f32.mrb[0].mxu0
    %v611 = vadd.f32 0.0, %v610
    %612 = vmatprep.mubr.bf16.mxu0 %v496
    %613 = vmatmul.mubr.bf16.gmra.mrb[0].mxu0 %v176
    %v614 = vpop.f32.mrb[0].mxu0
    %v615 = vadd.f32 0.0, %v614
    %v616 = vpop.f32.mrb[0].mxu0
    %v617 = vadd.f32 0.0, %v616
    %v618 = vpop.f32.mrb[0].mxu0
    %v619 = vadd.f32 0.0, %v618
    %v620 = vpop.f32.mrb[0].mxu0
    %v621 = vadd.f32 0.0, %v620
    %622 = vmatprep.mubr.bf16.mxu0 %v499
    %623 = vmatmul.mubr.bf16.gmra.mrb[0].mxu0 %v178
    %v624 = vpop.f32.mrb[0].mxu0
    %v625 = vadd.f32 0.0, %v624
    %v626 = vpop.f32.mrb[0].mxu0
    %v627 = vadd.f32 0.0, %v626
    %v628 = vpop.f32.mrb[0].mxu0
    %v629 = vadd.f32 0.0, %v628
    %v630 = vpop.f32.mrb[0].mxu0
    %v631 = vadd.f32 0.0, %v630
    %632 = vmatprep.mubr.bf16.mxu0 %v502
    %633 = vmatmul.mubr.bf16.gmra.mrb[0].mxu0 %v180
    %v634 = vpop.f32.mrb[0].mxu0
    %v635 = vadd.f32 0.0, %v634
    %v636 = vpop.f32.mrb[0].mxu0
    %v637 = vadd.f32 0.0, %v636
    %v638 = vpop.f32.mrb[0].mxu0
    %v639 = vadd.f32 0.0, %v638
    %v640 = vpop.f32.mrb[0].mxu0
    %v641 = vadd.f32 0.0, %v640
    %642 = vmatprep.mubr.bf16.mxu0 %v505
    %643 = vmatmul.mubr.bf16.gmra.mrb[0].mxu0 %v182
    %v644 = vpop.f32.mrb[0].mxu0
    %v645 = vadd.f32 0.0, %v644
    %v646 = vpop.f32.mrb[0].mxu0
    %v647 = vadd.f32 0.0, %v646
    %v648 = vpop.f32.mrb[0].mxu0
    %v649 = vadd.f32 0.0, %v648
    %v650 = vpop.f32.mrb[0].mxu0
    %v651 = vadd.f32 0.0, %v650
    %652 = vmatprep.mubr.bf16.mxu0 %v508
    %653 = vmatmul.mubr.bf16.gmra.mrb[0].mxu0 %v184
    %v654 = vpop.f32.mrb[0].mxu0
    %v655 = vadd.f32 0.0, %v654
    %v656 = vpop.f32.mrb[0].mxu0
    %v657 = vadd.f32 0.0, %v656
    %v658 = vpop.f32.mrb[0].mxu0
    %v659 = vadd.f32 0.0, %v658
    %v660 = vpop.f32.mrb[0].mxu0
    %v661 = vadd.f32 0.0, %v660
    %662 = vmatprep.mubr.bf16.mxu0 %v511
    %663 = vmatmul.mubr.bf16.gmra.mrb[0].mxu0 %v186
    %v664 = vpop.f32.mrb[0].mxu0
    %v665 = vadd.f32 0.0, %v664
    %v666 = vpop.f32.mrb[0].mxu0
    %v667 = vadd.f32 0.0, %v666
    %v668 = vpop.f32.mrb[0].mxu0
    %v669 = vadd.f32 0.0, %v668
    %v670 = vpop.f32.mrb[0].mxu0
    %v671 = vadd.f32 0.0, %v670
    %672 = vmatprep.mubr.bf16.mxu0 %v514
    %673 = vmatmul.mubr.bf16.gmra.mrb[0].mxu0 %v188
    %v674 = vpop.f32.mrb[0].mxu0
    %v675 = vadd.f32 0.0, %v674
    %v676 = vpop.f32.mrb[0].mxu0
    %v677 = vadd.f32 0.0, %v676
    %v678 = vpop.f32.mrb[0].mxu0
    %v679 = vadd.f32 0.0, %v678
    %v680 = vpop.f32.mrb[0].mxu0
    %v681 = vadd.f32 0.0, %v680
    %682 = vmatprep.mubr.bf16.mxu0 %v517
    %683 = vmatmul.mubr.bf16.gmra.mrb[0].mxu0 %v190
    %v684 = vpop.f32.mrb[0].mxu0
    %v685 = vadd.f32 0.0, %v684
    %v686 = vpop.f32.mrb[0].mxu0
    %v687 = vadd.f32 0.0, %v686
    %v688 = vpop.f32.mrb[0].mxu0
    %v689 = vadd.f32 0.0, %v688
    %v690 = vpop.f32.mrb[0].mxu0
    %v691 = vadd.f32 0.0, %v690
    %692 = vmatprep.mubr.bf16.mxu0 %v520
    %693 = vmatmul.mubr.bf16.gmra.mrb[0].mxu0 %v192
    %v694 = vpop.f32.mrb[0].mxu0
    %v695 = vadd.f32 0.0, %v694
    %v696 = vpop.f32.mrb[0].mxu0
    %v697 = vadd.f32 0.0, %v696
    %v698 = vpop.f32.mrb[0].mxu0
    %v699 = vadd.f32 0.0, %v698
    %v700 = vpop.f32.mrb[0].mxu0
    %v701 = vadd.f32 0.0, %v700
    %702 = vmatprep.mubr.bf16.mxu0 %v523
    %703 = vmatmul.mubr.bf16.gmra.mrb[0].mxu0 %v194
    %v704 = vpop.f32.mrb[0].mxu0
    %v705 = vadd.f32 0.0, %v704
    %v706 = vpop.f32.mrb[0].mxu0
    %v707 = vadd.f32 0.0, %v706
    %v708 = vpop.f32.mrb[0].mxu0
    %v709 = vadd.f32 0.0, %v708
    %v710 = vpop.f32.mrb[0].mxu0
    %v711 = vadd.f32 0.0, %v710
    %712 = vmatprep.mubr.bf16.mxu0 %v526
    %713 = vmatmul.mubr.bf16.gmra.mrb[0].mxu0 %v196
    %v714 = vpop.f32.mrb[0].mxu0
    %v715 = vadd.f32 0.0, %v714
    %v716 = vpop.f32.mrb[0].mxu0
    %v717 = vadd.f32 0.0, %v716
    %v718 = vpop.f32.mrb[0].mxu0
    %v719 = vpop.f32.mrb[0].mxu0
    %720 = vdwg.mxu0
    %721 = vmatprep.subr.bf16.mxu0 %v390
    %722 = vmatpush1.bf16.msra.mxu0 %v389
    %723 = vmatprep.subr.bf16.mxu0 %v397
    %724 = vmatpush1.bf16.msra.mxu0 %v396
    %725 = vmatprep.subr.bf16.mxu0 %v404
    %726 = vmatpush1.bf16.msra.mxu0 %v403
    %727 = vmatprep.subr.bf16.mxu0 %v411
    %728 = vmatpush1.bf16.msra.mxu0 %v410
    %729 = vmatprep.subr.bf16.mxu0 %v418
    %730 = vmatpush1.bf16.msra.mxu0 %v417
    %731 = vmatprep.subr.bf16.mxu0 %v425
    %732 = vmatpush1.bf16.msra.mxu0 %v424
    %733 = vmatprep.subr.bf16.mxu0 %v432
    %734 = vmatpush1.bf16.msra.mxu0 %v431
    %735 = vmatprep.subr.bf16.mxu0 %v439
    %736 = vmatpush1.bf16.msra.mxu0 %v438
    %737 = vmatprep.subr.bf16.mxu0 %v446
    %738 = vmatpush1.bf16.msra.mxu0 %v445
    %739 = vmatprep.subr.bf16.mxu0 %v453
    %740 = vmatpush1.bf16.msra.mxu0 %v452
    %741 = vmatprep.subr.bf16.mxu0 %v460
    %742 = vmatpush1.bf16.msra.mxu0 %v459
    %743 = vmatprep.subr.bf16.mxu0 %v467
    %744 = vmatpush1.bf16.msra.mxu0 %v466
    %745 = vmatprep.subr.bf16.mxu0 %v474
    %746 = vmatpush1.bf16.msra.mxu0 %v473
    %747 = vmatprep.subr.bf16.mxu0 %v539
    %748 = vmatpush1.bf16.msra.mxu0 %v536
    %749 = vmatprep.subr.bf16.mxu0 0
    %750 = vmatpush1.bf16.msra.mxu0 0
    %751 = vmatprep.subr.bf16.mxu0 0
    %752 = vmatpush1.bf16.msra.mxu0 0
    %753 = vmatprep.mubr.bf16.mxu0 %v487
    %754 = vmatmul.mubr.bf16.gmra.mrb[0].mxu0 %v170
    %v755 = vpop.f32.mrb[0].mxu0
    %v756 = vadd.f32 0.0, %v755
    %v757 = vpop.f32.mrb[0].mxu0
    %v758 = vadd.f32 0.0, %v757
    %v759 = vpop.f32.mrb[0].mxu0
    %v760 = vadd.f32 0.0, %v759
    %v761 = vpop.f32.mrb[0].mxu0
    %v762 = vadd.f32 0.0, %v761
    %763 = vmatprep.mubr.bf16.mxu0 %v490
    %764 = vmatmul.mubr.bf16.gmra.mrb[0].mxu0 %v172
    %v765 = vpop.f32.mrb[0].mxu0
    %v766 = vadd.f32 0.0, %v765
    %v767 = vpop.f32.mrb[0].mxu0
    %v768 = vadd.f32 0.0, %v767
    %v769 = vpop.f32.mrb[0].mxu0
    %v770 = vadd.f32 0.0, %v769
    %v771 = vpop.f32.mrb[0].mxu0
    %v772 = vadd.f32 0.0, %v771
    %773 = vmatprep.mubr.bf16.mxu0 %v493
    %774 = vmatmul.mubr.bf16.gmra.mrb[0].mxu0 %v174
    %v775 = vpop.f32.mrb[0].mxu0
    %v776 = vadd.f32 0.0, %v775
    %v777 = vpop.f32.mrb[0].mxu0
    %v778 = vadd.f32 0.0, %v777
    %v779 = vpop.f32.mrb[0].mxu0
    %v780 = vadd.f32 0.0, %v779
    %v781 = vpop.f32.mrb[0].mxu0
    %v782 = vadd.f32 0.0, %v781
    %783 = vmatprep.mubr.bf16.mxu0 %v496
    %784 = vmatmul.mubr.bf16.gmra.mrb[0].mxu0 %v176
    %v785 = vpop.f32.mrb[0].mxu0
    %v786 = vadd.f32 0.0, %v785
    %v787 = vpop.f32.mrb[0].mxu0
    %v788 = vadd.f32 0.0, %v787
    %v789 = vpop.f32.mrb[0].mxu0
    %v790 = vadd.f32 0.0, %v789
    %v791 = vpop.f32.mrb[0].mxu0
    %v792 = vadd.f32 0.0, %v791
    %793 = vmatprep.mubr.bf16.mxu0 %v499
    %794 = vmatmul.mubr.bf16.gmra.mrb[0].mxu0 %v178
    %v795 = vpop.f32.mrb[0].mxu0
    %v796 = vadd.f32 0.0, %v795
    %v797 = vpop.f32.mrb[0].mxu0
    %v798 = vadd.f32 0.0, %v797
    %v799 = vpop.f32.mrb[0].mxu0
    %v800 = vadd.f32 0.0, %v799
    %v801 = vpop.f32.mrb[0].mxu0
    %v802 = vadd.f32 0.0, %v801
    %803 = vmatprep.mubr.bf16.mxu0 %v502
    %804 = vmatmul.mubr.bf16.gmra.mrb[0].mxu0 %v180
    %v805 = vpop.f32.mrb[0].mxu0
    %v806 = vadd.f32 0.0, %v805
    %v807 = vpop.f32.mrb[0].mxu0
    %v808 = vadd.f32 0.0, %v807
    %v809 = vpop.f32.mrb[0].mxu0
    %v810 = vadd.f32 0.0, %v809
    %v811 = vpop.f32.mrb[0].mxu0
    %v812 = vadd.f32 0.0, %v811
    %813 = vmatprep.mubr.bf16.mxu0 %v505
    %814 = vmatmul.mubr.bf16.gmra.mrb[0].mxu0 %v182
    %v815 = vpop.f32.mrb[0].mxu0
    %v816 = vadd.f32 0.0, %v815
    %v817 = vpop.f32.mrb[0].mxu0
    %v818 = vadd.f32 0.0, %v817
    %v819 = vpop.f32.mrb[0].mxu0
    %v820 = vadd.f32 0.0, %v819
    %v821 = vpop.f32.mrb[0].mxu0
    %v822 = vadd.f32 0.0, %v821
    %823 = vmatprep.mubr.bf16.mxu0 %v508
    %824 = vmatmul.mubr.bf16.gmra.mrb[0].mxu0 %v184
    %v825 = vpop.f32.mrb[0].mxu0
    %v826 = vadd.f32 0.0, %v825
    %v827 = vpop.f32.mrb[0].mxu0
    %v828 = vadd.f32 0.0, %v827
    %v829 = vpop.f32.mrb[0].mxu0
    %v830 = vadd.f32 0.0, %v829
    %v831 = vpop.f32.mrb[0].mxu0
    %v832 = vadd.f32 0.0, %v831
    %833 = vmatprep.mubr.bf16.mxu0 %v511
    %834 = vmatmul.mubr.bf16.gmra.mrb[0].mxu0 %v186
    %v835 = vpop.f32.mrb[0].mxu0
    %v836 = vadd.f32 0.0, %v835
    %v837 = vpop.f32.mrb[0].mxu0
    %v838 = vadd.f32 0.0, %v837
    %v839 = vpop.f32.mrb[0].mxu0
    %v840 = vadd.f32 0.0, %v839
    %v841 = vpop.f32.mrb[0].mxu0
    %v842 = vadd.f32 0.0, %v841
    %843 = vmatprep.mubr.bf16.mxu0 %v514
    %844 = vmatmul.mubr.bf16.gmra.mrb[0].mxu0 %v188
    %v845 = vpop.f32.mrb[0].mxu0
    %v846 = vadd.f32 0.0, %v845
    %v847 = vpop.f32.mrb[0].mxu0
    %v848 = vadd.f32 0.0, %v847
    %v849 = vpop.f32.mrb[0].mxu0
    %v850 = vadd.f32 0.0, %v849
    %v851 = vpop.f32.mrb[0].mxu0
    %v852 = vadd.f32 0.0, %v851
    %853 = vmatprep.mubr.bf16.mxu0 %v517
    %854 = vmatmul.mubr.bf16.gmra.mrb[0].mxu0 %v190
    %v855 = vpop.f32.mrb[0].mxu0
    %v856 = vadd.f32 0.0, %v855
    %v857 = vpop.f32.mrb[0].mxu0
    %v858 = vadd.f32 0.0, %v857
    %v859 = vpop.f32.mrb[0].mxu0
    %v860 = vadd.f32 0.0, %v859
    %v861 = vpop.f32.mrb[0].mxu0
    %v862 = vadd.f32 0.0, %v861
    %863 = vmatprep.mubr.bf16.mxu0 %v520
    %864 = vmatmul.mubr.bf16.gmra.mrb[0].mxu0 %v192
    %v865 = vpop.f32.mrb[0].mxu0
    %v866 = vadd.f32 0.0, %v865
    %v867 = vpop.f32.mrb[0].mxu0
    %v868 = vadd.f32 0.0, %v867
    %v869 = vpop.f32.mrb[0].mxu0
    %v870 = vadd.f32 0.0, %v869
    %v871 = vpop.f32.mrb[0].mxu0
    %v872 = vadd.f32 0.0, %v871
    %873 = vmatprep.mubr.bf16.mxu0 %v523
    %874 = vmatmul.mubr.bf16.gmra.mrb[0].mxu0 %v194
    %v875 = vpop.f32.mrb[0].mxu0
    %v876 = vadd.f32 0.0, %v875
    %v877 = vpop.f32.mrb[0].mxu0
    %v878 = vadd.f32 0.0, %v877
    %v879 = vpop.f32.mrb[0].mxu0
    %v880 = vadd.f32 0.0, %v879
    %v881 = vpop.f32.mrb[0].mxu0
    %v882 = vadd.f32 0.0, %v881
    %883 = vmatprep.mubr.bf16.mxu0 %v526
    %884 = vmatmul.mubr.bf16.gmra.mrb[0].mxu0 %v196
    %v885 = vpop.f32.mrb[0].mxu0
    %v886 = vadd.f32 0.0, %v885
    %v887 = vpop.f32.mrb[0].mxu0
    %v888 = vadd.f32 0.0, %v887
    %v889 = vpop.f32.mrb[0].mxu0
    %v890 = vpop.f32.mrb[0].mxu0
    %891 = vdwg.mxu0
    %892 = vmatprep.subr.bf16.mxu0 %v392
    %893 = vmatpush1.bf16.msra.mxu0 %v391
    %894 = vmatprep.subr.bf16.mxu0 %v399
    %895 = vmatpush1.bf16.msra.mxu0 %v398
    %896 = vmatprep.subr.bf16.mxu0 %v406
    %897 = vmatpush1.bf16.msra.mxu0 %v405
    %898 = vmatprep.subr.bf16.mxu0 %v413
    %899 = vmatpush1.bf16.msra.mxu0 %v412
    %900 = vmatprep.subr.bf16.mxu0 %v420
    %901 = vmatpush1.bf16.msra.mxu0 %v419
    %902 = vmatprep.subr.bf16.mxu0 %v427
    %903 = vmatpush1.bf16.msra.mxu0 %v426
    %904 = vmatprep.subr.bf16.mxu0 %v434
    %905 = vmatpush1.bf16.msra.mxu0 %v433
    %906 = vmatprep.subr.bf16.mxu0 %v441
    %907 = vmatpush1.bf16.msra.mxu0 %v440
    %908 = vmatprep.subr.bf16.mxu0 %v448
    %909 = vmatpush1.bf16.msra.mxu0 %v447
    %910 = vmatprep.subr.bf16.mxu0 %v455
    %911 = vmatpush1.bf16.msra.mxu0 %v454
    %912 = vmatprep.subr.bf16.mxu0 %v462
    %913 = vmatpush1.bf16.msra.mxu0 %v461
    %914 = vmatprep.subr.bf16.mxu0 %v469
    %915 = vmatpush1.bf16.msra.mxu0 %v468
    %916 = vmatprep.subr.bf16.mxu0 %v476
    %917 = vmatpush1.bf16.msra.mxu0 %v475
    %918 = vmatprep.subr.bf16.mxu0 %v545
    %919 = vmatpush1.bf16.msra.mxu0 %v542
    %920 = vmatprep.subr.bf16.mxu0 0
    %921 = vmatpush1.bf16.msra.mxu0 0
    %922 = vmatprep.subr.bf16.mxu0 0
    %923 = vmatpush1.bf16.msra.mxu0 0
    %924 = vmatprep.mubr.bf16.mxu0 %v487
    %925 = vmatmul.mubr.bf16.gmra.mrb[0].mxu0 %v170
    %v926 = vpop.f32.mrb[0].mxu0
    %v927 = vadd.f32 0.0, %v926
    %v928 = vpop.f32.mrb[0].mxu0
    %v929 = vadd.f32 0.0, %v928
    %v930 = vpop.f32.mrb[0].mxu0
    %v931 = vadd.f32 0.0, %v930
    %v932 = vpop.f32.mrb[0].mxu0
    %v933 = vadd.f32 0.0, %v932
    %934 = vmatprep.mubr.bf16.mxu0 %v490
    %935 = vmatmul.mubr.bf16.gmra.mrb[0].mxu0 %v172
    %v936 = vpop.f32.mrb[0].mxu0
    %v937 = vadd.f32 0.0, %v936
    %v938 = vpop.f32.mrb[0].mxu0
    %v939 = vadd.f32 0.0, %v938
    %v940 = vpop.f32.mrb[0].mxu0
    %v941 = vadd.f32 0.0, %v940
    %v942 = vpop.f32.mrb[0].mxu0
    %v943 = vadd.f32 0.0, %v942
    %944 = vmatprep.mubr.bf16.mxu0 %v493
    %945 = vmatmul.mubr.bf16.gmra.mrb[0].mxu0 %v174
    %v946 = vpop.f32.mrb[0].mxu0
    %v947 = vadd.f32 0.0, %v946
    %v948 = vpop.f32.mrb[0].mxu0
    %v949 = vadd.f32 0.0, %v948
    %v950 = vpop.f32.mrb[0].mxu0
    %v951 = vadd.f32 0.0, %v950
    %v952 = vpop.f32.mrb[0].mxu0
    %v953 = vadd.f32 0.0, %v952
    %954 = vmatprep.mubr.bf16.mxu0 %v496
    %955 = vmatmul.mubr.bf16.gmra.mrb[0].mxu0 %v176
    %v956 = vpop.f32.mrb[0].mxu0
    %v957 = vadd.f32 0.0, %v956
    %v958 = vpop.f32.mrb[0].mxu0
    %v959 = vadd.f32 0.0, %v958
    %v960 = vpop.f32.mrb[0].mxu0
    %v961 = vadd.f32 0.0, %v960
    %v962 = vpop.f32.mrb[0].mxu0
    %v963 = vadd.f32 0.0, %v962
    %964 = vmatprep.mubr.bf16.mxu0 %v499
    %965 = vmatmul.mubr.bf16.gmra.mrb[0].mxu0 %v178
    %v966 = vpop.f32.mrb[0].mxu0
    %v967 = vadd.f32 0.0, %v966
    %v968 = vpop.f32.mrb[0].mxu0
    %v969 = vadd.f32 0.0, %v968
    %v970 = vpop.f32.mrb[0].mxu0
    %v971 = vadd.f32 0.0, %v970
    %v972 = vpop.f32.mrb[0].mxu0
    %v973 = vadd.f32 0.0, %v972
    %974 = vmatprep.mubr.bf16.mxu0 %v502
    %975 = vmatmul.mubr.bf16.gmra.mrb[0].mxu0 %v180
    %v976 = vpop.f32.mrb[0].mxu0
    %v977 = vadd.f32 0.0, %v976
    %v978 = vpop.f32.mrb[0].mxu0
    %v979 = vadd.f32 0.0, %v978
    %v980 = vpop.f32.mrb[0].mxu0
    %v981 = vadd.f32 0.0, %v980
    %v982 = vpop.f32.mrb[0].mxu0
    %v983 = vadd.f32 0.0, %v982
    %984 = vmatprep.mubr.bf16.mxu0 %v505
    %985 = vmatmul.mubr.bf16.gmra.mrb[0].mxu0 %v182
    %v986 = vpop.f32.mrb[0].mxu0
    %v987 = vadd.f32 0.0, %v986
    %v988 = vpop.f32.mrb[0].mxu0
    %v989 = vadd.f32 0.0, %v988
    %v990 = vpop.f32.mrb[0].mxu0
    %v991 = vadd.f32 0.0, %v990
    %v992 = vpop.f32.mrb[0].mxu0
    %v993 = vadd.f32 0.0, %v992
    %994 = vmatprep.mubr.bf16.mxu0 %v508
    %995 = vmatmul.mubr.bf16.gmra.mrb[0].mxu0 %v184
    %v996 = vpop.f32.mrb[0].mxu0
    %v997 = vadd.f32 0.0, %v996
    %v998 = vpop.f32.mrb[0].mxu0
    %v999 = vadd.f32 0.0, %v998
    %v1000 = vpop.f32.mrb[0].mxu0
    %v1001 = vadd.f32 0.0, %v1000
    %v1002 = vpop.f32.mrb[0].mxu0
    %v1003 = vadd.f32 0.0, %v1002
    %1004 = vmatprep.mubr.bf16.mxu0 %v511
    %1005 = vmatmul.mubr.bf16.gmra.mrb[0].mxu0 %v186
    %v1006 = vpop.f32.mrb[0].mxu0
    %v1007 = vadd.f32 0.0, %v1006
    %v1008 = vpop.f32.mrb[0].mxu0
    %v1009 = vadd.f32 0.0, %v1008
    %v1010 = vpop.f32.mrb[0].mxu0
    %v1011 = vadd.f32 0.0, %v1010
    %v1012 = vpop.f32.mrb[0].mxu0
    %v1013 = vadd.f32 0.0, %v1012
    %1014 = vmatprep.mubr.bf16.mxu0 %v514
    %1015 = vmatmul.mubr.bf16.gmra.mrb[0].mxu0 %v188
    %v1016 = vpop.f32.mrb[0].mxu0
    %v1017 = vadd.f32 0.0, %v1016
    %v1018 = vpop.f32.mrb[0].mxu0
    %v1019 = vadd.f32 0.0, %v1018
    %v1020 = vpop.f32.mrb[0].mxu0
    %v1021 = vadd.f32 0.0, %v1020
    %v1022 = vpop.f32.mrb[0].mxu0
    %v1023 = vadd.f32 0.0, %v1022
    %1024 = vmatprep.mubr.bf16.mxu0 %v517
    %1025 = vmatmul.mubr.bf16.gmra.mrb[0].mxu0 %v190
    %v1026 = vpop.f32.mrb[0].mxu0
    %v1027 = vadd.f32 0.0, %v1026
    %v1028 = vpop.f32.mrb[0].mxu0
    %v1029 = vadd.f32 0.0, %v1028
    %v1030 = vpop.f32.mrb[0].mxu0
    %v1031 = vadd.f32 0.0, %v1030
    %v1032 = vpop.f32.mrb[0].mxu0
    %v1033 = vadd.f32 0.0, %v1032
    %1034 = vmatprep.mubr.bf16.mxu0 %v520
    %1035 = vmatmul.mubr.bf16.gmra.mrb[0].mxu0 %v192
    %v1036 = vpop.f32.mrb[0].mxu0
    %v1037 = vadd.f32 0.0, %v1036
    %v1038 = vpop.f32.mrb[0].mxu0
    %v1039 = vadd.f32 0.0, %v1038
    %v1040 = vpop.f32.mrb[0].mxu0
    %v1041 = vadd.f32 0.0, %v1040
    %v1042 = vpop.f32.mrb[0].mxu0
    %v1043 = vadd.f32 0.0, %v1042
    %1044 = vmatprep.mubr.bf16.mxu0 %v523
    %1045 = vmatmul.mubr.bf16.gmra.mrb[0].mxu0 %v194
    %v1046 = vpop.f32.mrb[0].mxu0
    %v1047 = vadd.f32 0.0, %v1046
    %v1048 = vpop.f32.mrb[0].mxu0
    %v1049 = vadd.f32 0.0, %v1048
    %v1050 = vpop.f32.mrb[0].mxu0
    %v1051 = vadd.f32 0.0, %v1050
    %v1052 = vpop.f32.mrb[0].mxu0
    %v1053 = vadd.f32 0.0, %v1052
    %1054 = vmatprep.mubr.bf16.mxu0 %v526
    %1055 = vmatmul.mubr.bf16.gmra.mrb[0].mxu0 %v196
    %v1056 = vpop.f32.mrb[0].mxu0
    %v1057 = vadd.f32 0.0, %v1056
    %v1058 = vpop.f32.mrb[0].mxu0
    %v1059 = vadd.f32 0.0, %v1058
    %v1060 = vpop.f32.mrb[0].mxu0
    %v1061 = vpop.f32.mrb[0].mxu0
    %1062 = vdwg.mxu0
    %1063 = vmatprep.subr.bf16.mxu0 0
    %1064 = vmatpush1.bf16.msra.mxu0 %v393
    %1065 = vmatprep.subr.bf16.mxu0 0
    %1066 = vmatpush1.bf16.msra.mxu0 %v400
    %1067 = vmatprep.subr.bf16.mxu0 0
    %1068 = vmatpush1.bf16.msra.mxu0 %v407
    %1069 = vmatprep.subr.bf16.mxu0 0
    %1070 = vmatpush1.bf16.msra.mxu0 %v414
    %1071 = vmatprep.subr.bf16.mxu0 0
    %1072 = vmatpush1.bf16.msra.mxu0 %v421
    %1073 = vmatprep.subr.bf16.mxu0 0
    %1074 = vmatpush1.bf16.msra.mxu0 %v428
    %1075 = vmatprep.subr.bf16.mxu0 0
    %1076 = vmatpush1.bf16.msra.mxu0 %v435
    %1077 = vmatprep.subr.bf16.mxu0 0
    %1078 = vmatpush1.bf16.msra.mxu0 %v442
    %1079 = vmatprep.subr.bf16.mxu0 0
    %1080 = vmatpush1.bf16.msra.mxu0 %v449
    %1081 = vmatprep.subr.bf16.mxu0 0
    %1082 = vmatpush1.bf16.msra.mxu0 %v456
    %1083 = vmatprep.subr.bf16.mxu0 0
    %1084 = vmatpush1.bf16.msra.mxu0 %v463
    %1085 = vmatprep.subr.bf16.mxu0 0
    %1086 = vmatpush1.bf16.msra.mxu0 %v470
    %1087 = vmatprep.subr.bf16.mxu0 0
    %1088 = vmatpush1.bf16.msra.mxu0 %v477
    %1089 = vmatprep.subr.bf16.mxu0 0
    %1090 = vmatpush1.bf16.msra.mxu0 %v548
    %1091 = vmatprep.subr.bf16.mxu0 0
    %1092 = vmatpush1.bf16.msra.mxu0 0
    %1093 = vmatprep.subr.bf16.mxu0 0
    %1094 = vmatpush1.bf16.msra.mxu0 0
    %1095 = vmatprep.mubr.bf16.mxu0 %v487
    %1096 = vmatmul.mubr.bf16.gmra.mrb[0].mxu0 %v170
    %v1097 = vpop.f32.mrb[0].mxu0
    %v1098 = vadd.f32 0.0, %v1097
    %v1099 = vpop.f32.mrb[0].mxu0
    %v1100 = vpop.f32.mrb[0].mxu0
    %v1101 = vadd.f32 0.0, %v1100
    %v1102 = vpop.f32.mrb[0].mxu0
    %1103 = vmatprep.mubr.bf16.mxu0 %v490
    %1104 = vmatmul.mubr.bf16.gmra.mrb[0].mxu0 %v172
    %v1105 = vpop.f32.mrb[0].mxu0
    %v1106 = vadd.f32 0.0, %v1105
    %v1107 = vpop.f32.mrb[0].mxu0
    %v1108 = vpop.f32.mrb[0].mxu0
    %v1109 = vadd.f32 0.0, %v1108
    %v1110 = vpop.f32.mrb[0].mxu0
    %1111 = vmatprep.mubr.bf16.mxu0 %v493
    %1112 = vmatmul.mubr.bf16.gmra.mrb[0].mxu0 %v174
    %v1113 = vpop.f32.mrb[0].mxu0
    %v1114 = vadd.f32 0.0, %v1113
    %v1115 = vpop.f32.mrb[0].mxu0
    %v1116 = vpop.f32.mrb[0].mxu0
    %v1117 = vadd.f32 0.0, %v1116
    %v1118 = vpop.f32.mrb[0].mxu0
    %1119 = vmatprep.mubr.bf16.mxu0 %v496
    %1120 = vmatmul.mubr.bf16.gmra.mrb[0].mxu0 %v176
    %v1121 = vpop.f32.mrb[0].mxu0
    %v1122 = vadd.f32 0.0, %v1121
    %v1123 = vpop.f32.mrb[0].mxu0
    %v1124 = vpop.f32.mrb[0].mxu0
    %v1125 = vadd.f32 0.0, %v1124
    %v1126 = vpop.f32.mrb[0].mxu0
    %1127 = vmatprep.mubr.bf16.mxu0 %v499
    %1128 = vmatmul.mubr.bf16.gmra.mrb[0].mxu0 %v178
    %v1129 = vpop.f32.mrb[0].mxu0
    %v1130 = vadd.f32 0.0, %v1129
    %v1131 = vpop.f32.mrb[0].mxu0
    %v1132 = vpop.f32.mrb[0].mxu0
    %v1133 = vadd.f32 0.0, %v1132
    %v1134 = vpop.f32.mrb[0].mxu0
    %1135 = vmatprep.mubr.bf16.mxu0 %v502
    %1136 = vmatmul.mubr.bf16.gmra.mrb[0].mxu0 %v180
    %v1137 = vpop.f32.mrb[0].mxu0
    %v1138 = vadd.f32 0.0, %v1137
    %v1139 = vpop.f32.mrb[0].mxu0
    %v1140 = vpop.f32.mrb[0].mxu0
    %v1141 = vadd.f32 0.0, %v1140
    %v1142 = vpop.f32.mrb[0].mxu0
    %1143 = vmatprep.mubr.bf16.mxu0 %v505
    %1144 = vmatmul.mubr.bf16.gmra.mrb[0].mxu0 %v182
    %v1145 = vpop.f32.mrb[0].mxu0
    %v1146 = vadd.f32 0.0, %v1145
    %v1147 = vpop.f32.mrb[0].mxu0
    %v1148 = vpop.f32.mrb[0].mxu0
    %v1149 = vadd.f32 0.0, %v1148
    %v1150 = vpop.f32.mrb[0].mxu0
    %1151 = vmatprep.mubr.bf16.mxu0 %v508
    %1152 = vmatmul.mubr.bf16.gmra.mrb[0].mxu0 %v184
    %v1153 = vpop.f32.mrb[0].mxu0
    %v1154 = vadd.f32 0.0, %v1153
    %v1155 = vpop.f32.mrb[0].mxu0
    %v1156 = vpop.f32.mrb[0].mxu0
    %v1157 = vadd.f32 0.0, %v1156
    %v1158 = vpop.f32.mrb[0].mxu0
    %1159 = vmatprep.mubr.bf16.mxu0 %v511
    %1160 = vmatmul.mubr.bf16.gmra.mrb[0].mxu0 %v186
    %v1161 = vpop.f32.mrb[0].mxu0
    %v1162 = vadd.f32 0.0, %v1161
    %v1163 = vpop.f32.mrb[0].mxu0
    %v1164 = vpop.f32.mrb[0].mxu0
    %v1165 = vadd.f32 0.0, %v1164
    %v1166 = vpop.f32.mrb[0].mxu0
    %1167 = vmatprep.mubr.bf16.mxu0 %v514
    %1168 = vmatmul.mubr.bf16.gmra.mrb[0].mxu0 %v188
    %v1169 = vpop.f32.mrb[0].mxu0
    %v1170 = vadd.f32 0.0, %v1169
    %v1171 = vpop.f32.mrb[0].mxu0
    %v1172 = vpop.f32.mrb[0].mxu0
    %v1173 = vadd.f32 0.0, %v1172
    %v1174 = vpop.f32.mrb[0].mxu0
    %1175 = vmatprep.mubr.bf16.mxu0 %v517
    %1176 = vmatmul.mubr.bf16.gmra.mrb[0].mxu0 %v190
    %v1177 = vpop.f32.mrb[0].mxu0
    %v1178 = vadd.f32 0.0, %v1177
    %v1179 = vpop.f32.mrb[0].mxu0
    %v1180 = vpop.f32.mrb[0].mxu0
    %v1181 = vadd.f32 0.0, %v1180
    %v1182 = vpop.f32.mrb[0].mxu0
    %1183 = vmatprep.mubr.bf16.mxu0 %v520
    %1184 = vmatmul.mubr.bf16.gmra.mrb[0].mxu0 %v192
    %v1185 = vpop.f32.mrb[0].mxu0
    %v1186 = vadd.f32 0.0, %v1185
    %v1187 = vpop.f32.mrb[0].mxu0
    %v1188 = vpop.f32.mrb[0].mxu0
    %v1189 = vadd.f32 0.0, %v1188
    %v1190 = vpop.f32.mrb[0].mxu0
    %1191 = vmatprep.mubr.bf16.mxu0 %v523
    %1192 = vmatmul.mubr.bf16.gmra.mrb[0].mxu0 %v194
    %v1193 = vpop.f32.mrb[0].mxu0
    %v1194 = vadd.f32 0.0, %v1193
    %v1195 = vpop.f32.mrb[0].mxu0
    %v1196 = vpop.f32.mrb[0].mxu0
    %v1197 = vadd.f32 0.0, %v1196
    %v1198 = vpop.f32.mrb[0].mxu0
    %1199 = vmatprep.mubr.bf16.mxu0 %v526
    %1200 = vmatmul.mubr.bf16.gmra.mrb[0].mxu0 %v196
    %v1201 = vpop.f32.mrb[0].mxu0
    %v1202 = vadd.f32 0.0, %v1201
    %v1203 = vpop.f32.mrb[0].mxu0
    %v1204 = vpop.f32.mrb[0].mxu0
    %v1205 = vpop.f32.mrb[0].mxu0
    %1206 = vdwg.mxu0
    %1207 = vst [vmem:[#allocation7] sm:$0xff] %v585
    %1208 = vst [vmem:[#allocation7 + $0x8] sm:$0xff] %v587
    %1209 = vst [vmem:[#allocation7 + $0x10] sm:$0xff] %v756
    %1210 = vst [vmem:[#allocation7 + $0x18] sm:$0xff] %v758
    %1211 = vst [vmem:[#allocation7 + $0x20] sm:$0xff] %v927
    %1212 = vst [vmem:[#allocation7 + $0x28] sm:$0xff] %v929
    %vm1213 = vcmask 130048
    %1214 = vst.msk [vmem:[#allocation7 + $0x30] sm:$0xff] %vm1213, %v1098
    %1215 = vst [vmem:[#allocation7 + $0x38] sm:$0xff] %v589
    %1216 = vst [vmem:[#allocation7 + $0x40] sm:$0xff] %v591
    %1217 = vst [vmem:[#allocation7 + $0x48] sm:$0xff] %v760
    %1218 = vst [vmem:[#allocation7 + $0x50] sm:$0xff] %v762
    %1219 = vst [vmem:[#allocation7 + $0x58] sm:$0xff] %v931
    %1220 = vst [vmem:[#allocation7 + $0x60] sm:$0xff] %v933
    %1221 = vst.msk [vmem:[#allocation7 + $0x68] sm:$0xff] %vm1213, %v1101
    %1222 = vst [vmem:[#allocation7 + $0x70] sm:$0xff] %v595
    %1223 = vst [vmem:[#allocation7 + $0x78] sm:$0xff] %v597
    %1224 = vst [vmem:[#allocation7 + $0x80] sm:$0xff] %v766
    %1225 = vst [vmem:[#allocation7 + $0x88] sm:$0xff] %v768
    %1226 = vst [vmem:[#allocation7 + $0x90] sm:$0xff] %v937
    %1227 = vst [vmem:[#allocation7 + $0x98] sm:$0xff] %v939
    %1228 = vst.msk [vmem:[#allocation7 + $0xa0] sm:$0xff] %vm1213, %v1106
    %1229 = vst [vmem:[#allocation7 + $0xa8] sm:$0xff] %v599
    %1230 = vst [vmem:[#allocation7 + $0xb0] sm:$0xff] %v601
    %1231 = vst [vmem:[#allocation7 + $0xb8] sm:$0xff] %v770
    %1232 = vst [vmem:[#allocation7 + $0xc0] sm:$0xff] %v772
    %1233 = vst [vmem:[#allocation7 + $0xc8] sm:$0xff] %v941
    %1234 = vst [vmem:[#allocation7 + $0xd0] sm:$0xff] %v943
    %1235 = vst.msk [vmem:[#allocation7 + $0xd8] sm:$0xff] %vm1213, %v1109
    %1236 = vst [vmem:[#allocation7 + $0xe0] sm:$0xff] %v605
    %1237 = vst [vmem:[#allocation7 + $0xe8] sm:$0xff] %v607
    %1238 = vst [vmem:[#allocation7 + $0xf0] sm:$0xff] %v776
    %1239 = vst [vmem:[#allocation7 + $0xf8] sm:$0xff] %v778
    %1240 = vst [vmem:[#allocation7 + $0x100] sm:$0xff] %v947
    %1241 = vst [vmem:[#allocation7 + $0x108] sm:$0xff] %v949
    %1242 = vst.msk [vmem:[#allocation7 + $0x110] sm:$0xff] %vm1213, %v1114
    %1243 = vst [vmem:[#allocation7 + $0x118] sm:$0xff] %v609
    %1244 = vst [vmem:[#allocation7 + $0x120] sm:$0xff] %v611
    %1245 = vst [vmem:[#allocation7 + $0x128] sm:$0xff] %v780
    %1246 = vst [vmem:[#allocation7 + $0x130] sm:$0xff] %v782
    %1247 = vst [vmem:[#allocation7 + $0x138] sm:$0xff] %v951
    %1248 = vst [vmem:[#allocation7 + $0x140] sm:$0xff] %v953
    %1249 = vst.msk [vmem:[#allocation7 + $0x148] sm:$0xff] %vm1213, %v1117
    %1250 = vst [vmem:[#allocation7 + $0x150] sm:$0xff] %v615
    %1251 = vst [vmem:[#allocation7 + $0x158] sm:$0xff] %v617
    %1252 = vst [vmem:[#allocation7 + $0x160] sm:$0xff] %v786
    %1253 = vst [vmem:[#allocation7 + $0x168] sm:$0xff] %v788
    %1254 = vst [vmem:[#allocation7 + $0x170] sm:$0xff] %v957
    %1255 = vst [vmem:[#allocation7 + $0x178] sm:$0xff] %v959
    %1256 = vst.msk [vmem:[#allocation7 + $0x180] sm:$0xff] %vm1213, %v1122
    %1257 = vst [vmem:[#allocation7 + $0x188] sm:$0xff] %v619
    %1258 = vst [vmem:[#allocation7 + $0x190] sm:$0xff] %v621
    %1259 = vst [vmem:[#allocation7 + $0x198] sm:$0xff] %v790
    %1260 = vst [vmem:[#allocation7 + $0x1a0] sm:$0xff] %v792
    %1261 = vst [vmem:[#allocation7 + $0x1a8] sm:$0xff] %v961
    %1262 = vst [vmem:[#allocation7 + $0x1b0] sm:$0xff] %v963
    %1263 = vst.msk [vmem:[#allocation7 + $0x1b8] sm:$0xff] %vm1213, %v1125
    %1264 = vst [vmem:[#allocation7 + $0x1c0] sm:$0xff] %v625
    %1265 = vst [vmem:[#allocation7 + $0x1c8] sm:$0xff] %v627
    %1266 = vst [vmem:[#allocation7 + $0x1d0] sm:$0xff] %v796
    %1267 = vst [vmem:[#allocation7 + $0x1d8] sm:$0xff] %v798
    %1268 = vst [vmem:[#allocation7 + $0x1e0] sm:$0xff] %v967
    %1269 = vst [vmem:[#allocation7 + $0x1e8] sm:$0xff] %v969
    %1270 = vst.msk [vmem:[#allocation7 + $0x1f0] sm:$0xff] %vm1213, %v1130
    %1271 = vst [vmem:[#allocation7 + $0x1f8] sm:$0xff] %v629
    %1272 = vst [vmem:[#allocation7 + $0x200] sm:$0xff] %v631
    %1273 = vst [vmem:[#allocation7 + $0x208] sm:$0xff] %v800
    %1274 = vst [vmem:[#allocation7 + $0x210] sm:$0xff] %v802
    %1275 = vst [vmem:[#allocation7 + $0x218] sm:$0xff] %v971
    %1276 = vst [vmem:[#allocation7 + $0x220] sm:$0xff] %v973
    %1277 = vst.msk [vmem:[#allocation7 + $0x228] sm:$0xff] %vm1213, %v1133
    %1278 = vst [vmem:[#allocation7 + $0x230] sm:$0xff] %v635
    %1279 = vst [vmem:[#allocation7 + $0x238] sm:$0xff] %v637
    %1280 = vst [vmem:[#allocation7 + $0x240] sm:$0xff] %v806
    %1281 = vst [vmem:[#allocation7 + $0x248] sm:$0xff] %v808
    %1282 = vst [vmem:[#allocation7 + $0x250] sm:$0xff] %v977
    %1283 = vst [vmem:[#allocation7 + $0x258] sm:$0xff] %v979
    %1284 = vst.msk [vmem:[#allocation7 + $0x260] sm:$0xff] %vm1213, %v1138
    %1285 = vst [vmem:[#allocation7 + $0x268] sm:$0xff] %v639
    %1286 = vst [vmem:[#allocation7 + $0x270] sm:$0xff] %v641
    %1287 = vst [vmem:[#allocation7 + $0x278] sm:$0xff] %v810
    %1288 = vst [vmem:[#allocation7 + $0x280] sm:$0xff] %v812
    %1289 = vst [vmem:[#allocation7 + $0x288] sm:$0xff] %v981
    %1290 = vst [vmem:[#allocation7 + $0x290] sm:$0xff] %v983
    %1291 = vst.msk [vmem:[#allocation7 + $0x298] sm:$0xff] %vm1213, %v1141
    %1292 = vst [vmem:[#allocation7 + $0x2a0] sm:$0xff] %v645
    %1293 = vst [vmem:[#allocation7 + $0x2a8] sm:$0xff] %v647
    %1294 = vst [vmem:[#allocation7 + $0x2b0] sm:$0xff] %v816
    %1295 = vst [vmem:[#allocation7 + $0x2b8] sm:$0xff] %v818
    %1296 = vst [vmem:[#allocation7 + $0x2c0] sm:$0xff] %v987
    %1297 = vst [vmem:[#allocation7 + $0x2c8] sm:$0xff] %v989
    %1298 = vst.msk [vmem:[#allocation7 + $0x2d0] sm:$0xff] %vm1213, %v1146
    %1299 = vst [vmem:[#allocation7 + $0x2d8] sm:$0xff] %v649
    %1300 = vst [vmem:[#allocation7 + $0x2e0] sm:$0xff] %v651
    %1301 = vst [vmem:[#allocation7 + $0x2e8] sm:$0xff] %v820
    %1302 = vst [vmem:[#allocation7 + $0x2f0] sm:$0xff] %v822
    %1303 = vst [vmem:[#allocation7 + $0x2f8] sm:$0xff] %v991
    %1304 = vst [vmem:[#allocation7 + $0x300] sm:$0xff] %v993
    %1305 = vst.msk [vmem:[#allocation7 + $0x308] sm:$0xff] %vm1213, %v1149
    %1306 = vst [vmem:[#allocation7 + $0x310] sm:$0xff] %v655
    %1307 = vst [vmem:[#allocation7 + $0x318] sm:$0xff] %v657
    %1308 = vst [vmem:[#allocation7 + $0x320] sm:$0xff] %v826
    %1309 = vst [vmem:[#allocation7 + $0x328] sm:$0xff] %v828
    %1310 = vst [vmem:[#allocation7 + $0x330] sm:$0xff] %v997
    %1311 = vst [vmem:[#allocation7 + $0x338] sm:$0xff] %v999
    %1312 = vst.msk [vmem:[#allocation7 + $0x340] sm:$0xff] %vm1213, %v1154
    %1313 = vst [vmem:[#allocation7 + $0x348] sm:$0xff] %v659
    %1314 = vst [vmem:[#allocation7 + $0x350] sm:$0xff] %v661
    %1315 = vst [vmem:[#allocation7 + $0x358] sm:$0xff] %v830
    %1316 = vst [vmem:[#allocation7 + $0x360] sm:$0xff] %v832
    %1317 = vst [vmem:[#allocation7 + $0x368] sm:$0xff] %v1001
    %1318 = vst [vmem:[#allocation7 + $0x370] sm:$0xff] %v1003
    %1319 = vst.msk [vmem:[#allocation7 + $0x378] sm:$0xff] %vm1213, %v1157
    %1320 = vst [vmem:[#allocation7 + $0x380] sm:$0xff] %v665
    %1321 = vst [vmem:[#allocation7 + $0x388] sm:$0xff] %v667
    %1322 = vst [vmem:[#allocation7 + $0x390] sm:$0xff] %v836
    %1323 = vst [vmem:[#allocation7 + $0x398] sm:$0xff] %v838
    %1324 = vst [vmem:[#allocation7 + $0x3a0] sm:$0xff] %v1007
    %1325 = vst [vmem:[#allocation7 + $0x3a8] sm:$0xff] %v1009
    %1326 = vst.msk [vmem:[#allocation7 + $0x3b0] sm:$0xff] %vm1213, %v1162
    %1327 = vst [vmem:[#allocation7 + $0x3b8] sm:$0xff] %v669
    %1328 = vst [vmem:[#allocation7 + $0x3c0] sm:$0xff] %v671
    %1329 = vst [vmem:[#allocation7 + $0x3c8] sm:$0xff] %v840
    %1330 = vst [vmem:[#allocation7 + $0x3d0] sm:$0xff] %v842
    %1331 = vst [vmem:[#allocation7 + $0x3d8] sm:$0xff] %v1011
    %1332 = vst [vmem:[#allocation7 + $0x3e0] sm:$0xff] %v1013
    %1333 = vst.msk [vmem:[#allocation7 + $0x3e8] sm:$0xff] %vm1213, %v1165
    %1334 = vst [vmem:[#allocation7 + $0x3f0] sm:$0xff] %v675
    %1335 = vst [vmem:[#allocation7 + $0x3f8] sm:$0xff] %v677
    %1336 = vst [vmem:[#allocation7 + $0x400] sm:$0xff] %v846
    %1337 = vst [vmem:[#allocation7 + $0x408] sm:$0xff] %v848
    %1338 = vst [vmem:[#allocation7 + $0x410] sm:$0xff] %v1017
    %1339 = vst [vmem:[#allocation7 + $0x418] sm:$0xff] %v1019
    %1340 = vst.msk [vmem:[#allocation7 + $0x420] sm:$0xff] %vm1213, %v1170
    %1341 = vst [vmem:[#allocation7 + $0x428] sm:$0xff] %v679
    %1342 = vst [vmem:[#allocation7 + $0x430] sm:$0xff] %v681
    %1343 = vst [vmem:[#allocation7 + $0x438] sm:$0xff] %v850
    %1344 = vst [vmem:[#allocation7 + $0x440] sm:$0xff] %v852
    %1345 = vst [vmem:[#allocation7 + $0x448] sm:$0xff] %v1021
    %1346 = vst [vmem:[#allocation7 + $0x450] sm:$0xff] %v1023
    %1347 = vst.msk [vmem:[#allocation7 + $0x458] sm:$0xff] %vm1213, %v1173
    %1348 = vst [vmem:[#allocation7 + $0x460] sm:$0xff] %v685
    %1349 = vst [vmem:[#allocation7 + $0x468] sm:$0xff] %v687
    %1350 = vst [vmem:[#allocation7 + $0x470] sm:$0xff] %v856
    %1351 = vst [vmem:[#allocation7 + $0x478] sm:$0xff] %v858
    %1352 = vst [vmem:[#allocation7 + $0x480] sm:$0xff] %v1027
    %1353 = vst [vmem:[#allocation7 + $0x488] sm:$0xff] %v1029
    %1354 = vst.msk [vmem:[#allocation7 + $0x490] sm:$0xff] %vm1213, %v1178
    %1355 = vst [vmem:[#allocation7 + $0x498] sm:$0xff] %v689
    %1356 = vst [vmem:[#allocation7 + $0x4a0] sm:$0xff] %v691
    %1357 = vst [vmem:[#allocation7 + $0x4a8] sm:$0xff] %v860
    %1358 = vst [vmem:[#allocation7 + $0x4b0] sm:$0xff] %v862
    %1359 = vst [vmem:[#allocation7 + $0x4b8] sm:$0xff] %v1031
    %1360 = vst [vmem:[#allocation7 + $0x4c0] sm:$0xff] %v1033
    %1361 = vst.msk [vmem:[#allocation7 + $0x4c8] sm:$0xff] %vm1213, %v1181
    %1362 = vst [vmem:[#allocation7 + $0x4d0] sm:$0xff] %v695
    %1363 = vst [vmem:[#allocation7 + $0x4d8] sm:$0xff] %v697
    %1364 = vst [vmem:[#allocation7 + $0x4e0] sm:$0xff] %v866
    %1365 = vst [vmem:[#allocation7 + $0x4e8] sm:$0xff] %v868
    %1366 = vst [vmem:[#allocation7 + $0x4f0] sm:$0xff] %v1037
    %1367 = vst [vmem:[#allocation7 + $0x4f8] sm:$0xff] %v1039
    %1368 = vst.msk [vmem:[#allocation7 + $0x500] sm:$0xff] %vm1213, %v1186
    %1369 = vst [vmem:[#allocation7 + $0x508] sm:$0xff] %v699
    %1370 = vst [vmem:[#allocation7 + $0x510] sm:$0xff] %v701
    %1371 = vst [vmem:[#allocation7 + $0x518] sm:$0xff] %v870
    %1372 = vst [vmem:[#allocation7 + $0x520] sm:$0xff] %v872
    %1373 = vst [vmem:[#allocation7 + $0x528] sm:$0xff] %v1041
    %1374 = vst [vmem:[#allocation7 + $0x530] sm:$0xff] %v1043
    %1375 = vst.msk [vmem:[#allocation7 + $0x538] sm:$0xff] %vm1213, %v1189
    %1376 = vst [vmem:[#allocation7 + $0x540] sm:$0xff] %v705
    %1377 = vst [vmem:[#allocation7 + $0x548] sm:$0xff] %v707
    %1378 = vst [vmem:[#allocation7 + $0x550] sm:$0xff] %v876
    %1379 = vst [vmem:[#allocation7 + $0x558] sm:$0xff] %v878
    %1380 = vst [vmem:[#allocation7 + $0x560] sm:$0xff] %v1047
    %1381 = vst [vmem:[#allocation7 + $0x568] sm:$0xff] %v1049
    %1382 = vst.msk [vmem:[#allocation7 + $0x570] sm:$0xff] %vm1213, %v1194
    %1383 = vst [vmem:[#allocation7 + $0x578] sm:$0xff] %v709
    %1384 = vst [vmem:[#allocation7 + $0x580] sm:$0xff] %v711
    %1385 = vst [vmem:[#allocation7 + $0x588] sm:$0xff] %v880
    %1386 = vst [vmem:[#allocation7 + $0x590] sm:$0xff] %v882
    %1387 = vst [vmem:[#allocation7 + $0x598] sm:$0xff] %v1051
    %1388 = vst [vmem:[#allocation7 + $0x5a0] sm:$0xff] %v1053
    %1389 = vst.msk [vmem:[#allocation7 + $0x5a8] sm:$0xff] %vm1213, %v1197
    %1390 = vst [vmem:[#allocation7 + $0x5b0] sm:$0xff] %v715
    %1391 = vst [vmem:[#allocation7 + $0x5b8] sm:$0xff] %v717
    %1392 = vst [vmem:[#allocation7 + $0x5c0] sm:$0xff] %v886
    %1393 = vst [vmem:[#allocation7 + $0x5c8] sm:$0xff] %v888
    %1394 = vst [vmem:[#allocation7 + $0x5d0] sm:$0xff] %v1057
    %1395 = vst [vmem:[#allocation7 + $0x5d8] sm:$0xff] %v1059
    %1396 = vst.msk [vmem:[#allocation7 + $0x5e0] sm:$0xff] %vm1213, %v1202
    // Predicated region
    $region22: #{tpu_custom_call.1} parent=1 // pred_check
      _
    $region23: #{tpu_custom_call.1} parent=1 // pred_check_branch
      %1398 = sbr.rel (0) target = $region25
    $region24: #{tpu_custom_call.1} parent=1 // pred_region
      %s1400 = ssub.s32 24192, 24192
      %1401 = vsyncadd [#allocation4], %s1400
      %s1402 = sshll.u32 [#allocation7], 4
      %s1403 = int_to_ptr.vmem [resolvable:$true] %s1402
      %1408 = dma.vmem_to_hbm [thread:$0]  %s1403, 24192, %s3, [#allocation4], 896, 896, 56
    $region25: #{tpu_custom_call.1} parent=1 // pred_fallthru
      _
    // Predicated region
    $region26: #{tpu_custom_call.1} parent=1 // pred_check
      _
    $region27: #{tpu_custom_call.1} parent=1 // pred_check_branch
      %1410 = sbr.rel (0) target = $region29
    $region28: #{tpu_custom_call.1} parent=1 // pred_region
      %1411 = dma.done [#allocation4], 24192
    $region29: #{tpu_custom_call.1} parent=1 // pred_fallthru
      _
    %1412 = vsyncpa [#allocation3], 1
    %1413 = vsyncpa [#allocation6], 1
    %1414 = vsyncpa [#allocation4], 1

</llo_original>
